<compile_context>
chip_gen: v7x
topology: tpu7x:2x2x1
jax: 0.10.0
libtpu: 0.0.40
codegen_flags: <defaults>
</compile_context>

<pallas_src>
import functools

import numpy as np
import jax
import jax.numpy as jnp
from jax.experimental import pallas as pl
from jax.experimental.pallas import tpu as pltpu

ATOM_FDIM = 16     # chemprop.features.get_atom_fdim()  (synthetic)
BOND_FDIM = 24     # chemprop.features.get_bond_fdim()  (synthetic)
HIDDEN = 32        # hparams.mpn_hidden_size
DEPTH = 3          # hparams.mpn_depth

LANE = 128         # pad every feature / contraction axis to the TPU lane width
SUBLANE = 8


def _round_up(x, m):
    return ((x + m - 1) // m) * m


# ----------------------------------------------------------------------------
# Fused Pallas kernel: entire MPN forward in one launch, VMEM-resident state
# ----------------------------------------------------------------------------
def _mpn_fused_kernel(fb_ref, fa_ref, magg_ref, ain_ref, p_ref,
                      wi_ref, wh_ref, wo_ref, bo_ref, out_ref, *, depth):
    # inputs = W_i(f_bonds) ; message = relu(inputs)  (both stay on-chip)
    inputs = jnp.dot(fb_ref[...], wi_ref[...],
                     preferred_element_type=jnp.float32)
    message = jnp.maximum(inputs, 0.0)

    # depth-1 message-passing iterations:
    #   agg     = a_message[b2a] - message[b2revb]  ==  M_agg @ message
    #   message = relu(inputs + W_h(agg))           (dropout: eval identity)
    for _ in range(depth - 1):
        agg = jnp.dot(magg_ref[...], message,
                      preferred_element_type=jnp.float32)
        h = jnp.dot(agg, wh_ref[...], preferred_element_type=jnp.float32)
        message = jnp.maximum(inputs + h, 0.0)

    # a_message = index_select_ND(message, a2b).sum(1)  ==  A_in @ message
    a_message = jnp.dot(ain_ref[...], message,
                        preferred_element_type=jnp.float32)

    # atom_hiddens = relu(W_o([f_atoms | a_message]) + b_o)  -- one matmul
    a_input = jnp.concatenate([fa_ref[...], a_message], axis=1)
    atom_hiddens = jnp.maximum(
        jnp.dot(a_input, wo_ref[...], preferred_element_type=jnp.float32)
        + bo_ref[...], 0.0)

    # per-molecule mean readout (zero row == cached_zero_vector)
    out_ref[...] = jnp.dot(p_ref[...], atom_hiddens,
                           preferred_element_type=jnp.float32)


def mpn_forward(f_bonds, f_atoms, M_agg, A_in, P,
                W_i_t, W_h_t, W_o_t, b_o, *, depth=DEPTH):
    NB, BF = f_bonds.shape
    NA, AF = f_atoms.shape
    NM = P.shape[0]
    H = W_i_t.shape[1]
    kernel = functools.partial(_mpn_fused_kernel, depth=depth)
    return pl.pallas_call(
        kernel,
        out_shape=jax.ShapeDtypeStruct((NM, H), jnp.float32),
        grid=(1,),   # whole (tiny) padded problem fits VMEM in one step
        in_specs=[pl.BlockSpec((NB, BF), lambda i: (0, 0)),      # f_bonds
                  pl.BlockSpec((NA, AF), lambda i: (0, 0)),      # f_atoms
                  pl.BlockSpec((NB, NB), lambda i: (0, 0)),      # M_agg
                  pl.BlockSpec((NA, NB), lambda i: (0, 0)),      # A_in
                  pl.BlockSpec((NM, NA), lambda i: (0, 0)),      # P
                  pl.BlockSpec((BF, H), lambda i: (0, 0)),       # W_i^T
                  pl.BlockSpec((H, H), lambda i: (0, 0)),        # W_h^T
                  pl.BlockSpec((AF + H, H), lambda i: (0, 0)),   # W_o^T
                  pl.BlockSpec((1, H), lambda i: (0, 0))],       # b_o
        out_specs=pl.BlockSpec((NM, H), lambda i: (0, 0)),
        compiler_params=pltpu.CompilerParams(
            dimension_semantics=("arbitrary",)),
    )(f_bonds, f_atoms, M_agg, A_in, P, W_i_t, W_h_t, W_o_t, b_o)


# ----------------------------------------------------------------------------
# Independent NumPy float64 reference mirroring the PyTorch MPN.forward
# ----------------------------------------------------------------------------
def reference_forward(W_i, W_h, W_o, b_o, f_atoms, f_bonds,
                      a2b, b2a, b2revb, a_scope, depth=DEPTH):
    W_i_t = W_i.T.astype(np.float64)
    W_h_t = W_h.T.astype(np.float64)
    W_o_t = W_o.T.astype(np.float64)
    bias = b_o.astype(np.float64)
    fb = f_bonds.astype(np.float64)
    fa = f_atoms.astype(np.float64)

    inputs = fb @ W_i_t
    message = np.maximum(inputs, 0.0)
    for _ in range(depth - 1):
        a_message = message[a2b].sum(axis=1)          # index_select_ND(...).sum(1)
        rev_message = message[b2revb]
        message = np.maximum(inputs + (a_message[b2a] - rev_message) @ W_h_t, 0.0)
    a_message = message[a2b].sum(axis=1)
    a_input = np.concatenate([fa, a_message], axis=1)
    atom_hiddens = np.maximum(a_input @ W_o_t + bias, 0.0)

    mol_vecs = []
    for (a_start, a_size) in a_scope:
        if a_size == 0:
            mol_vecs.append(np.zeros((HIDDEN,), np.float64))   # cached_zero_vector
        else:
            mol_vecs.append(atom_hiddens[a_start:a_start + a_size].sum(0) / a_size)
    return np.stack(mol_vecs, axis=0)


# ----------------------------------------------------------------------------
# Synthetic molecular graph + deterministic parameters (+ padded kernel form)
# ----------------------------------------------------------------------------
def build_example():
    key = jax.random.PRNGKey(0)
    k_wi, k_wh, k_wo, k_bo, k_fa, k_fb = jax.random.split(key, 6)

    # --- graph: 2 chain molecules (5 and 4 atoms) + 1 empty molecule ---------
    mol_atoms = [list(range(1, 6)), list(range(6, 10))]   # global atom indices
    n_atoms = 10                                          # incl. padding atom 0
    edges = []
    for atoms in mol_atoms:
        for u, v in zip(atoms[:-1], atoms[1:]):
            edges.append((u, v))

    MAX_NB = 4
    a2b_lists = [[] for _ in range(n_atoms)]
    b2a = [0]
    b2revb = [0]
    b = 1
    for (u, v) in edges:
        b2a += [u, v]               # bond b: u->v, bond b+1: v->u
        a2b_lists[v].append(b)      # incoming to v
        a2b_lists[u].append(b + 1)  # incoming to u
        b2revb += [b + 1, b]
        b += 2
    n_bonds = b                     # 15 (incl. padding bond 0)
    a_scope = [(1, 5), (6, 4), (10, 0)]
    n_mols = len(a_scope)

    a2b = np.zeros((n_atoms, MAX_NB), np.int32)
    for a, lst in enumerate(a2b_lists):
        a2b[a, :len(lst)] = lst
    b2a_arr = np.asarray(b2a, np.int32)
    b2revb_arr = np.asarray(b2revb, np.int32)

    # features: row 0 is the zero padding row (chemprop convention)
    f_atoms = np.zeros((n_atoms, ATOM_FDIM), np.float32)
    f_atoms[1:] = np.asarray(
        jax.random.normal(k_fa, (n_atoms - 1, ATOM_FDIM), jnp.float32))
    f_bonds = np.zeros((n_bonds, BOND_FDIM), np.float32)
    f_bonds[1:] = np.asarray(
        jax.random.normal(k_fb, (n_bonds - 1, BOND_FDIM), jnp.float32))

    # parameters (PyTorch nn.Linear weight shapes)
    W_i = np.asarray(jax.random.normal(k_wi, (HIDDEN, BOND_FDIM), jnp.float32)) * 0.1
    W_h = np.asarray(jax.random.normal(k_wh, (HIDDEN, HIDDEN), jnp.float32)) * 0.1
    W_o = np.asarray(jax.random.normal(
        k_wo, (HIDDEN, ATOM_FDIM + HIDDEN), jnp.float32)) * 0.1
    b_o = np.asarray(jax.random.normal(k_bo, (HIDDEN,), jnp.float32)) * 0.1

    ref_data = (W_i, W_h, W_o, b_o, f_atoms, f_bonds,
                a2b, b2a_arr, b2revb_arr, a_scope)

    # --- kernel-side padded, matmul-form inputs ------------------------------
    NA = LANE                                   # padded atom count
    NB = LANE                                   # padded bond count
    NM = _round_up(max(n_mols, SUBLANE), SUBLANE)
    AF = LANE                                   # padded atom_fdim
    BF = LANE                                   # padded bond_fdim
    H = LANE                                    # padded hidden (lane-dense out)

    f_atoms_p = np.zeros((NA, AF), np.float32)
    f_atoms_p[:n_atoms, :ATOM_FDIM] = f_atoms
    f_bonds_p = np.zeros((NB, BF), np.float32)
    f_bonds_p[:n_bonds, :BOND_FDIM] = f_bonds

    # A_in @ message == index_select_ND(message, a2b).sum(1)
    A_in = np.zeros((NA, NB), np.float32)
    for a, lst in enumerate(a2b_lists):
        for bb in lst:
            A_in[a, bb] += 1.0
    # S_b2a @ a_message == a_message[b2a]
    S_b2a = np.zeros((NB, NA), np.float32)
    for bb in range(n_bonds):
        S_b2a[bb, b2a[bb]] = 1.0
    # R @ message == message[b2revb]
    R = np.zeros((NB, NB), np.float32)
    for bb in range(n_bonds):
        R[bb, b2revb[bb]] = 1.0
    # fused per-iteration aggregation matrix
    M_agg = (S_b2a @ A_in - R).astype(np.float32)

    # per-molecule mean readout; empty molecule -> zero row (cached_zero_vector)
    P = np.zeros((NM, NA), np.float32)
    for m, (a_start, a_size) in enumerate(a_scope):
        if a_size > 0:
            P[m, a_start:a_start + a_size] = 1.0 / a_size

    # padded, pre-transposed weights (zero-padded rows/cols are inert)
    W_i_t = np.zeros((BF, H), np.float32)
    W_i_t[:BOND_FDIM, :HIDDEN] = W_i.T
    W_h_t = np.zeros((H, H), np.float32)
    W_h_t[:HIDDEN, :HIDDEN] = W_h.T
    W_o_t = np.zeros((AF + H, H), np.float32)
    W_o_t[:ATOM_FDIM, :HIDDEN] = W_o[:, :ATOM_FDIM].T       # atom-feature rows
    W_o_t[AF:AF + HIDDEN, :HIDDEN] = W_o[:, ATOM_FDIM:].T   # hidden rows
    b_o_p = np.zeros((1, H), np.float32)
    b_o_p[0, :HIDDEN] = b_o

    kernel_args = tuple(jnp.asarray(x) for x in
                        (f_bonds_p, f_atoms_p, M_agg, A_in, P,
                         W_i_t, W_h_t, W_o_t, b_o_p))
    return kernel_args, ref_data, n_mols


if __name__ == "__main__":
    kernel_args, ref_data, n_mols = build_example()

    out = mpn_forward(*kernel_args, depth=DEPTH)
    out = jax.block_until_ready(out)
    mol_vecs = np.asarray(out)[:n_mols, :HIDDEN]   # drop row / lane padding

    ref = reference_forward(*ref_data, depth=DEPTH)

    # Tolerance leaves slack for the MXU's multi-pass reduced-precision f32
    # matmul path vs. the float64 NumPy reference.
    np.testing.assert_allclose(mol_vecs, ref, rtol=2e-2, atol=2e-2)
    assert mol_vecs.shape == (3, HIDDEN)
    # empty molecule -> cached_zero_vector (all zeros, exact: zero pooling row)
    assert float(np.abs(mol_vecs[2]).max()) == 0.0

    print("KERNEL_OK")
</pallas_src>

<mosaic_0001>
module attributes {stable_mosaic.version = 11 : i64} {
  func.func @_mpn_fused_kernel(%arg0: i32, %arg1: memref<128x128xf32, #tpu.memory_space<vmem>>, %arg2: memref<128x128xf32, #tpu.memory_space<vmem>>, %arg3: memref<128x128xf32, #tpu.memory_space<vmem>>, %arg4: memref<128x128xf32, #tpu.memory_space<vmem>>, %arg5: memref<8x128xf32, #tpu.memory_space<vmem>>, %arg6: memref<128x128xf32, #tpu.memory_space<vmem>>, %arg7: memref<128x128xf32, #tpu.memory_space<vmem>>, %arg8: memref<256x128xf32, #tpu.memory_space<vmem>>, %arg9: memref<1x128xf32, #tpu.memory_space<vmem>>, %arg10: memref<8x128xf32, #tpu.memory_space<vmem>>) attributes {dimension_semantics = [#tpu.dimension_semantics<arbitrary>], iteration_bounds = array<i64: 1>, scalar_prefetch = 0 : i64, scratch_operands = 0 : i64, tpu.core_type = #tpu.core_type<tc>, window_params = [{pipeline_mode = #tpu.pipeline_mode<synchronous>, transform_indices = @transform_0, window_bounds = array<i64: 128, 128>}, {pipeline_mode = #tpu.pipeline_mode<synchronous>, transform_indices = @transform_1, window_bounds = array<i64: 128, 128>}, {pipeline_mode = #tpu.pipeline_mode<synchronous>, transform_indices = @transform_2, window_bounds = array<i64: 128, 128>}, {pipeline_mode = #tpu.pipeline_mode<synchronous>, transform_indices = @transform_3, window_bounds = array<i64: 128, 128>}, {pipeline_mode = #tpu.pipeline_mode<synchronous>, transform_indices = @transform_4, window_bounds = array<i64: 8, 128>}, {pipeline_mode = #tpu.pipeline_mode<synchronous>, transform_indices = @transform_5, window_bounds = array<i64: 128, 128>}, {pipeline_mode = #tpu.pipeline_mode<synchronous>, transform_indices = @transform_6, window_bounds = array<i64: 128, 128>}, {pipeline_mode = #tpu.pipeline_mode<synchronous>, transform_indices = @transform_7, window_bounds = array<i64: 256, 128>}, {pipeline_mode = #tpu.pipeline_mode<synchronous>, transform_indices = @transform_8, window_bounds = array<i64: 1, 128>}, {pipeline_mode = #tpu.pipeline_mode<synchronous>, transform_indices = @transform_9, window_bounds = array<i64: 8, 128>}]} {
    %c0 = arith.constant 0 : index
    %c0_0 = arith.constant 0 : index
    %0 = vector.load %arg1[%c0, %c0_0] : memref<128x128xf32, #tpu.memory_space<vmem>>, vector<128x128xf32>
    %c0_1 = arith.constant 0 : index
    %c0_2 = arith.constant 0 : index
    %1 = vector.load %arg6[%c0_1, %c0_2] : memref<128x128xf32, #tpu.memory_space<vmem>>, vector<128x128xf32>
    %cst = arith.constant dense<0.000000e+00> : vector<128x128xf32>
    %2 = tpu.matmul %0, %1, %cst {dimension_numbers = #tpu.dot_dimension_numbers<[1], [0], [0], [1], [0, 0, 1, 1], [], []>} : vector<128x128xf32>, vector<128x128xf32>, vector<128x128xf32> -> vector<128x128xf32>
    %cst_3 = arith.constant 0.000000e+00 : f32
    %3 = vector.broadcast %cst_3 : f32 to vector<128x128xf32>
    %4 = arith.maximumf %2, %3 : vector<128x128xf32>
    %c0_4 = arith.constant 0 : index
    %c0_5 = arith.constant 0 : index
    %5 = vector.load %arg3[%c0_4, %c0_5] : memref<128x128xf32, #tpu.memory_space<vmem>>, vector<128x128xf32>
    %cst_6 = arith.constant dense<0.000000e+00> : vector<128x128xf32>
    %6 = tpu.matmul %5, %4, %cst_6 {dimension_numbers = #tpu.dot_dimension_numbers<[1], [0], [0], [1], [0, 0, 1, 1], [], []>} : vector<128x128xf32>, vector<128x128xf32>, vector<128x128xf32> -> vector<128x128xf32>
    %c0_7 = arith.constant 0 : index
    %c0_8 = arith.constant 0 : index
    %7 = vector.load %arg7[%c0_7, %c0_8] : memref<128x128xf32, #tpu.memory_space<vmem>>, vector<128x128xf32>
    %cst_9 = arith.constant dense<0.000000e+00> : vector<128x128xf32>
    %8 = tpu.matmul %6, %7, %cst_9 {dimension_numbers = #tpu.dot_dimension_numbers<[1], [0], [0], [1], [0, 0, 1, 1], [], []>} : vector<128x128xf32>, vector<128x128xf32>, vector<128x128xf32> -> vector<128x128xf32>
    %9 = arith.addf %2, %8 : vector<128x128xf32>
    %cst_10 = arith.constant 0.000000e+00 : f32
    %10 = vector.broadcast %cst_10 : f32 to vector<128x128xf32>
    %11 = arith.maximumf %9, %10 : vector<128x128xf32>
    %c0_11 = arith.constant 0 : index
    %c0_12 = arith.constant 0 : index
    %12 = vector.load %arg3[%c0_11, %c0_12] : memref<128x128xf32, #tpu.memory_space<vmem>>, vector<128x128xf32>
    %cst_13 = arith.constant dense<0.000000e+00> : vector<128x128xf32>
    %13 = tpu.matmul %12, %11, %cst_13 {dimension_numbers = #tpu.dot_dimension_numbers<[1], [0], [0], [1], [0, 0, 1, 1], [], []>} : vector<128x128xf32>, vector<128x128xf32>, vector<128x128xf32> -> vector<128x128xf32>
    %c0_14 = arith.constant 0 : index
    %c0_15 = arith.constant 0 : index
    %14 = vector.load %arg7[%c0_14, %c0_15] : memref<128x128xf32, #tpu.memory_space<vmem>>, vector<128x128xf32>
    %cst_16 = arith.constant dense<0.000000e+00> : vector<128x128xf32>
    %15 = tpu.matmul %13, %14, %cst_16 {dimension_numbers = #tpu.dot_dimension_numbers<[1], [0], [0], [1], [0, 0, 1, 1], [], []>} : vector<128x128xf32>, vector<128x128xf32>, vector<128x128xf32> -> vector<128x128xf32>
    %16 = arith.addf %2, %15 : vector<128x128xf32>
    %cst_17 = arith.constant 0.000000e+00 : f32
    %17 = vector.broadcast %cst_17 : f32 to vector<128x128xf32>
    %18 = arith.maximumf %16, %17 : vector<128x128xf32>
    %c0_18 = arith.constant 0 : index
    %c0_19 = arith.constant 0 : index
    %19 = vector.load %arg4[%c0_18, %c0_19] : memref<128x128xf32, #tpu.memory_space<vmem>>, vector<128x128xf32>
    %cst_20 = arith.constant dense<0.000000e+00> : vector<128x128xf32>
    %20 = tpu.matmul %19, %18, %cst_20 {dimension_numbers = #tpu.dot_dimension_numbers<[1], [0], [0], [1], [0, 0, 1, 1], [], []>} : vector<128x128xf32>, vector<128x128xf32>, vector<128x128xf32> -> vector<128x128xf32>
    %c0_21 = arith.constant 0 : index
    %c0_22 = arith.constant 0 : index
    %21 = vector.load %arg2[%c0_21, %c0_22] : memref<128x128xf32, #tpu.memory_space<vmem>>, vector<128x128xf32>
    %22 = tpu.concatenate %21, %20 in 1 : vector<128x128xf32>, vector<128x128xf32> -> vector<128x256xf32>
    %c0_23 = arith.constant 0 : index
    %c0_24 = arith.constant 0 : index
    %23 = vector.load %arg8[%c0_23, %c0_24] : memref<256x128xf32, #tpu.memory_space<vmem>>, vector<256x128xf32>
    %cst_25 = arith.constant dense<0.000000e+00> : vector<128x128xf32>
    %24 = tpu.matmul %22, %23, %cst_25 {dimension_numbers = #tpu.dot_dimension_numbers<[1], [0], [0], [1], [0, 0, 1, 1], [], []>} : vector<128x256xf32>, vector<256x128xf32>, vector<128x128xf32> -> vector<128x128xf32>
    %c0_26 = arith.constant 0 : index
    %c0_27 = arith.constant 0 : index
    %25 = vector.load %arg9[%c0_26, %c0_27] : memref<1x128xf32, #tpu.memory_space<vmem>>, vector<1x128xf32>
    %26 = vector.broadcast %25 : vector<1x128xf32> to vector<128x128xf32>
    %27 = arith.addf %24, %26 : vector<128x128xf32>
    %cst_28 = arith.constant 0.000000e+00 : f32
    %28 = vector.broadcast %cst_28 : f32 to vector<128x128xf32>
    %29 = arith.maximumf %27, %28 : vector<128x128xf32>
    %c0_29 = arith.constant 0 : index
    %c0_30 = arith.constant 0 : index
    %30 = vector.load %arg5[%c0_29, %c0_30] : memref<8x128xf32, #tpu.memory_space<vmem>>, vector<8x128xf32>
    %cst_31 = arith.constant dense<0.000000e+00> : vector<8x128xf32>
    %31 = tpu.matmul %30, %29, %cst_31 {dimension_numbers = #tpu.dot_dimension_numbers<[1], [0], [0], [1], [0, 0, 1, 1], [], []>} : vector<8x128xf32>, vector<128x128xf32>, vector<8x128xf32> -> vector<8x128xf32>
    %c0_32 = arith.constant 0 : index
    %c0_33 = arith.constant 0 : index
    %32 = vector.load %arg10[%c0_32, %c0_33] : memref<8x128xf32, #tpu.memory_space<vmem>>, vector<8x128xf32>
    tpu.vector_store %arg10[%c0_32, %c0_33], %31 {strides = array<i32>} : memref<8x128xf32, #tpu.memory_space<vmem>>, vector<8x128xf32>,
    return
  }
  func.func @transform_0(%arg0: i32) -> (i32, i32) {
    %c0_i32 = arith.constant 0 : i32
    %c0_i32_0 = arith.constant 0 : i32
    %c0_i32_1 = arith.constant 0 : i32
    return %c0_i32, %c0_i32_0 : i32, i32
  }
  func.func @transform_1(%arg0: i32) -> (i32, i32) {
    %c0_i32 = arith.constant 0 : i32
    %c0_i32_0 = arith.constant 0 : i32
    %c0_i32_1 = arith.constant 0 : i32
    return %c0_i32, %c0_i32_0 : i32, i32
  }
  func.func @transform_2(%arg0: i32) -> (i32, i32) {
    %c0_i32 = arith.constant 0 : i32
    %c0_i32_0 = arith.constant 0 : i32
    %c0_i32_1 = arith.constant 0 : i32
    return %c0_i32, %c0_i32_0 : i32, i32
  }
  func.func @transform_3(%arg0: i32) -> (i32, i32) {
    %c0_i32 = arith.constant 0 : i32
    %c0_i32_0 = arith.constant 0 : i32
    %c0_i32_1 = arith.constant 0 : i32
    return %c0_i32, %c0_i32_0 : i32, i32
  }
  func.func @transform_4(%arg0: i32) -> (i32, i32) {
    %c0_i32 = arith.constant 0 : i32
    %c0_i32_0 = arith.constant 0 : i32
    %c0_i32_1 = arith.constant 0 : i32
    return %c0_i32, %c0_i32_0 : i32, i32
  }
  func.func @transform_5(%arg0: i32) -> (i32, i32) {
    %c0_i32 = arith.constant 0 : i32
    %c0_i32_0 = arith.constant 0 : i32
    %c0_i32_1 = arith.constant 0 : i32
    return %c0_i32, %c0_i32_0 : i32, i32
  }
  func.func @transform_6(%arg0: i32) -> (i32, i32) {
    %c0_i32 = arith.constant 0 : i32
    %c0_i32_0 = arith.constant 0 : i32
    %c0_i32_1 = arith.constant 0 : i32
    return %c0_i32, %c0_i32_0 : i32, i32
  }
  func.func @transform_7(%arg0: i32) -> (i32, i32) {
    %c0_i32 = arith.constant 0 : i32
    %c0_i32_0 = arith.constant 0 : i32
    %c0_i32_1 = arith.constant 0 : i32
    return %c0_i32, %c0_i32_0 : i32, i32
  }
  func.func @transform_8(%arg0: i32) -> (i32, i32) {
    %c0_i32 = arith.constant 0 : i32
    %c0_i32_0 = arith.constant 0 : i32
    %c0_i32_1 = arith.constant 0 : i32
    return %c0_i32, %c0_i32_0 : i32, i32
  }
  func.func @transform_9(%arg0: i32) -> (i32, i32) {
    %c0_i32 = arith.constant 0 : i32
    %c0_i32_0 = arith.constant 0 : i32
    %c0_i32_1 = arith.constant 0 : i32
    return %c0_i32, %c0_i32_0 : i32, i32
  }
}

</mosaic_0001>

<llo_original>
// kernel: tpu_custom_call.1
$region0: #{tpu_custom_call.1}
  #allocation0 [shape = 'u32[]', space=smem, size = 0x4, offset = 0x4, fixed_abs, tag = 'smem constant byte address 0x4 - core index']
  #allocation1 [shape = 'u32[144,128]{1,0:T(1,128)}', space=vmem, size = 0x12000, scoped, tag = 'internal scratch']
  %s0 = inlined_call_operand.hbm [shape: f32[128,128], index: 0, kind: input, shape index: {}]
  %s1 = inlined_call_operand.hbm [shape: f32[128,128], index: 1, kind: input, shape index: {}]
  %s2 = inlined_call_operand.hbm [shape: f32[128,128], index: 2, kind: input, shape index: {}]
  %s3 = inlined_call_operand.hbm [shape: f32[128,128], index: 3, kind: input, shape index: {}]
  %s4 = inlined_call_operand.vmem [shape: f32[8,128], index: 4, kind: input, shape index: {}]
  %s5 = inlined_call_operand.hbm [shape: f32[128,128], index: 5, kind: input, shape index: {}]
  %s6 = inlined_call_operand.hbm [shape: f32[128,128], index: 6, kind: input, shape index: {}]
  %s7 = inlined_call_operand.hbm [shape: f32[256,128], index: 7, kind: input, shape index: {}]
  %s8 = inlined_call_operand.vmem [shape: f32[1,128], index: 8, kind: input, shape index: {}]
  %s9 = inlined_call_operand.hbm [shape: f32[8,128], index: 9, kind: output, shape index: {}]
  %s10 = sld [smem:[#allocation0]]
  $region74: #{tpu_custom_call.1} parent=0
    _
  %s12 = ssub.s32 1, %s10
  %s13 = scalar_select 0, %s12, %s10
  $region1: #{tpu_custom_call.1} parent=0
    #allocation2 [shape = 'u8[65536]{0}', space=vmem, size = 0x10000, scoped, tag = 'input window, operand 0, single buffered']
    #allocation3 [shape = 's32[1]{0}', space=sflag, size = 0x4, scoped, tag = 'scoped memory for tpu_custom_call.1']
    #allocation4 [shape = 's32[1]{0}', space=sflag, size = 0x4, scoped, tag = 'scoped memory for tpu_custom_call.1']
    #allocation5 [shape = 'u8[65536]{0}', space=vmem, size = 0x10000, scoped, tag = 'input window, operand 1, single buffered']
    #allocation6 [shape = 's32[1]{0}', space=sflag, size = 0x4, scoped, tag = 'scoped memory for tpu_custom_call.1']
    #allocation7 [shape = 'u8[65536]{0}', space=vmem, size = 0x10000, scoped, tag = 'input window, operand 2, single buffered']
    #allocation8 [shape = 'u8[65536]{0}', space=vmem, size = 0x10000, scoped, tag = 'input window, operand 3, single buffered']
    #allocation9 [shape = 's32[1]{0}', space=sflag, size = 0x4, scoped, tag = 'scoped memory for tpu_custom_call.1']
    #allocation10 [shape = 'u8[65536]{0}', space=vmem, size = 0x10000, scoped, tag = 'input window, operand 5, single buffered']
    #allocation11 [shape = 'u8[65536]{0}', space=vmem, size = 0x10000, scoped, tag = 'input window, operand 6, single buffered']
    #allocation12 [shape = 's32[1]{0}', space=sflag, size = 0x4, scoped, tag = 'scoped memory for tpu_custom_call.1']
    #allocation13 [shape = 'u8[131072]{0}', space=vmem, size = 0x20000, scoped, tag = 'input window, operand 7, single buffered']
    #allocation14 [shape = 'u8[4096]{0}', space=vmem, size = 0x1000, scoped, tag = 'output window, operand 0, single buffered']
    %14 = vsyncpa [#allocation3], 0
    %15 = vsyncpa [#allocation6], 0
    %16 = vsyncpa [#allocation9], 0
    %17 = vsyncpa [#allocation12], 0
    %18 = vsyncpa [#allocation4], 0
    // Predicated region
    $region2: #{tpu_custom_call.1} parent=1 // pred_check
      _
    $region3: #{tpu_custom_call.1} parent=1 // pred_check_branch
      %20 = sbr.rel (0) target = $region5
    $region4: #{tpu_custom_call.1} parent=1 // pred_region
      %s22 = ssub.s32 2048, 2048
      %23 = vsyncadd [#allocation3], %s22
      %s24 = sshll.u32 [#allocation2], 4
      %s25 = int_to_ptr.vmem [resolvable:$true] %s24
      %30 = dma.hbm_to_vmem [thread:$0]  %s0, 2048, %s25, [#allocation3], 128, 128, 8
    $region5: #{tpu_custom_call.1} parent=1 // pred_fallthru
      _
    // Predicated region
    $region6: #{tpu_custom_call.1} parent=1 // pred_check
      _
    $region7: #{tpu_custom_call.1} parent=1 // pred_check_branch
      %32 = sbr.rel (0) target = $region9
    $region8: #{tpu_custom_call.1} parent=1 // pred_region
      %s34 = ssub.s32 2048, 2048
      %35 = vsyncadd [#allocation6], %s34
      %s36 = sshll.u32 [#allocation5], 4
      %s37 = int_to_ptr.vmem [resolvable:$true] %s36
      %42 = dma.hbm_to_vmem [thread:$0]  %s1, 2048, %s37, [#allocation6], 128, 128, 8
    $region9: #{tpu_custom_call.1} parent=1 // pred_fallthru
      _
    // Predicated region
    $region10: #{tpu_custom_call.1} parent=1 // pred_check
      _
    $region11: #{tpu_custom_call.1} parent=1 // pred_check_branch
      %44 = sbr.rel (0) target = $region13
    $region12: #{tpu_custom_call.1} parent=1 // pred_region
      %s46 = ssub.s32 2048, 2048
      %47 = vsyncadd [#allocation6], %s46
      %s48 = sshll.u32 [#allocation7], 4
      %s49 = int_to_ptr.vmem [resolvable:$true] %s48
      %54 = dma.hbm_to_vmem [thread:$0]  %s2, 2048, %s49, [#allocation6], 128, 128, 8
    $region13: #{tpu_custom_call.1} parent=1 // pred_fallthru
      _
    // Predicated region
    $region14: #{tpu_custom_call.1} parent=1 // pred_check
      _
    $region15: #{tpu_custom_call.1} parent=1 // pred_check_branch
      %56 = sbr.rel (0) target = $region17
    $region16: #{tpu_custom_call.1} parent=1 // pred_region
      %s58 = ssub.s32 2048, 2048
      %59 = vsyncadd [#allocation9], %s58
      %s60 = sshll.u32 [#allocation8], 4
      %s61 = int_to_ptr.vmem [resolvable:$true] %s60
      %66 = dma.hbm_to_vmem [thread:$0]  %s3, 2048, %s61, [#allocation9], 128, 128, 8
    $region17: #{tpu_custom_call.1} parent=1 // pred_fallthru
      _
    // Predicated region
    $region18: #{tpu_custom_call.1} parent=1 // pred_check
      _
    $region19: #{tpu_custom_call.1} parent=1 // pred_check_branch
      %68 = sbr.rel (0) target = $region21
    $region20: #{tpu_custom_call.1} parent=1 // pred_region
      _
    $region21: #{tpu_custom_call.1} parent=1 // pred_fallthru
      _
    // Predicated region
    $region22: #{tpu_custom_call.1} parent=1 // pred_check
      _
    $region23: #{tpu_custom_call.1} parent=1 // pred_check_branch
      %70 = sbr.rel (0) target = $region25
    $region24: #{tpu_custom_call.1} parent=1 // pred_region
      %s72 = ssub.s32 2048, 2048
      %73 = vsyncadd [#allocation9], %s72
      %s74 = sshll.u32 [#allocation10], 4
      %s75 = int_to_ptr.vmem [resolvable:$true] %s74
      %80 = dma.hbm_to_vmem [thread:$0]  %s5, 2048, %s75, [#allocation9], 128, 128, 8
    $region25: #{tpu_custom_call.1} parent=1 // pred_fallthru
      _
    // Predicated region
    $region26: #{tpu_custom_call.1} parent=1 // pred_check
      _
    $region27: #{tpu_custom_call.1} parent=1 // pred_check_branch
      %82 = sbr.rel (0) target = $region29
    $region28: #{tpu_custom_call.1} parent=1 // pred_region
      %s84 = ssub.s32 2048, 2048
      %85 = vsyncadd [#allocation12], %s84
      %s86 = sshll.u32 [#allocation11], 4
      %s87 = int_to_ptr.vmem [resolvable:$true] %s86
      %92 = dma.hbm_to_vmem [thread:$0]  %s6, 2048, %s87, [#allocation12], 128, 128, 8
    $region29: #{tpu_custom_call.1} parent=1 // pred_fallthru
      _
    // Predicated region
    $region30: #{tpu_custom_call.1} parent=1 // pred_check
      _
    $region31: #{tpu_custom_call.1} parent=1 // pred_check_branch
      %94 = sbr.rel (0) target = $region33
    $region32: #{tpu_custom_call.1} parent=1 // pred_region
      %s96 = ssub.s32 4096, 4096
      %97 = vsyncadd [#allocation12], %s96
      %s98 = sshll.u32 [#allocation13], 4
      %s99 = int_to_ptr.vmem [resolvable:$true] %s98
      %104 = dma.hbm_to_vmem [thread:$0]  %s7, 4096, %s99, [#allocation12], 128, 128, 8
    $region33: #{tpu_custom_call.1} parent=1 // pred_fallthru
      _
    // Predicated region
    $region34: #{tpu_custom_call.1} parent=1 // pred_check
      _
    $region35: #{tpu_custom_call.1} parent=1 // pred_check_branch
      %106 = sbr.rel (0) target = $region37
    $region36: #{tpu_custom_call.1} parent=1 // pred_region
      _
    $region37: #{tpu_custom_call.1} parent=1 // pred_fallthru
      _
    // Predicated region
    $region38: #{tpu_custom_call.1} parent=1 // pred_check
      _
    $region39: #{tpu_custom_call.1} parent=1 // pred_check_branch
      %108 = sbr.rel (0) target = $region41
    $region40: #{tpu_custom_call.1} parent=1 // pred_region
      %109 = dma.done [#allocation3], 2048
    $region41: #{tpu_custom_call.1} parent=1 // pred_fallthru
      _
    // Predicated region
    $region42: #{tpu_custom_call.1} parent=1 // pred_check
      _
    $region43: #{tpu_custom_call.1} parent=1 // pred_check_branch
      %111 = sbr.rel (0) target = $region45
    $region44: #{tpu_custom_call.1} parent=1 // pred_region
      %112 = dma.done [#allocation6], 2048
    $region45: #{tpu_custom_call.1} parent=1 // pred_fallthru
      _
    // Predicated region
    $region46: #{tpu_custom_call.1} parent=1 // pred_check
      _
    $region47: #{tpu_custom_call.1} parent=1 // pred_check_branch
      %114 = sbr.rel (0) target = $region49
    $region48: #{tpu_custom_call.1} parent=1 // pred_region
      %115 = dma.done [#allocation6], 2048
    $region49: #{tpu_custom_call.1} parent=1 // pred_fallthru
      _
    // Predicated region
    $region50: #{tpu_custom_call.1} parent=1 // pred_check
      _
    $region51: #{tpu_custom_call.1} parent=1 // pred_check_branch
      %117 = sbr.rel (0) target = $region53
    $region52: #{tpu_custom_call.1} parent=1 // pred_region
      %118 = dma.done [#allocation9], 2048
    $region53: #{tpu_custom_call.1} parent=1 // pred_fallthru
      _
    // Predicated region
    $region54: #{tpu_custom_call.1} parent=1 // pred_check
      _
    $region55: #{tpu_custom_call.1} parent=1 // pred_check_branch
      %120 = sbr.rel (0) target = $region57
    $region56: #{tpu_custom_call.1} parent=1 // pred_region
      %121 = dma.done [#allocation9], 2048
    $region57: #{tpu_custom_call.1} parent=1 // pred_fallthru
      _
    // Predicated region
    $region58: #{tpu_custom_call.1} parent=1 // pred_check
      _
    $region59: #{tpu_custom_call.1} parent=1 // pred_check_branch
      %123 = sbr.rel (0) target = $region61
    $region60: #{tpu_custom_call.1} parent=1 // pred_region
      %124 = dma.done [#allocation12], 2048
    $region61: #{tpu_custom_call.1} parent=1 // pred_fallthru
      _
    // Predicated region
    $region62: #{tpu_custom_call.1} parent=1 // pred_check
      _
    $region63: #{tpu_custom_call.1} parent=1 // pred_check_branch
      %126 = sbr.rel (0) target = $region65
    $region64: #{tpu_custom_call.1} parent=1 // pred_region
      %127 = dma.done [#allocation12], 4096
    $region65: #{tpu_custom_call.1} parent=1 // pred_fallthru
      _
    %v128 = vld [vmem:[#allocation2] sm:$0xff]
    %v129 = vld [vmem:[#allocation2 + $0x8] sm:$0xff]
    %v130 = vld [vmem:[#allocation2 + $0x10] sm:$0xff]
    %v131 = vld [vmem:[#allocation2 + $0x18] sm:$0xff]
    %v132 = vld [vmem:[#allocation2 + $0x20] sm:$0xff]
    %v133 = vld [vmem:[#allocation2 + $0x28] sm:$0xff]
    %v134 = vld [vmem:[#allocation2 + $0x30] sm:$0xff]
    %v135 = vld [vmem:[#allocation2 + $0x38] sm:$0xff]
    %v136 = vld [vmem:[#allocation2 + $0x40] sm:$0xff]
    %v137 = vld [vmem:[#allocation2 + $0x48] sm:$0xff]
    %v138 = vld [vmem:[#allocation2 + $0x50] sm:$0xff]
    %v139 = vld [vmem:[#allocation2 + $0x58] sm:$0xff]
    %v140 = vld [vmem:[#allocation2 + $0x60] sm:$0xff]
    %v141 = vld [vmem:[#allocation2 + $0x68] sm:$0xff]
    %v142 = vld [vmem:[#allocation2 + $0x70] sm:$0xff]
    %v143 = vld [vmem:[#allocation2 + $0x78] sm:$0xff]
    %v144 = vld [vmem:[#allocation10] sm:$0xff]
    %v145 = vld [vmem:[#allocation10 + $0x8] sm:$0xff]
    %v146 = vld [vmem:[#allocation10 + $0x10] sm:$0xff]
    %v147 = vld [vmem:[#allocation10 + $0x18] sm:$0xff]
    %v148 = vld [vmem:[#allocation10 + $0x20] sm:$0xff]
    %v149 = vld [vmem:[#allocation10 + $0x28] sm:$0xff]
    %v150 = vld [vmem:[#allocation10 + $0x30] sm:$0xff]
    %v151 = vld [vmem:[#allocation10 + $0x38] sm:$0xff]
    %v152 = vld [vmem:[#allocation10 + $0x40] sm:$0xff]
    %v153 = vld [vmem:[#allocation10 + $0x48] sm:$0xff]
    %v154 = vld [vmem:[#allocation10 + $0x50] sm:$0xff]
    %v155 = vld [vmem:[#allocation10 + $0x58] sm:$0xff]
    %v156 = vld [vmem:[#allocation10 + $0x60] sm:$0xff]
    %v157 = vld [vmem:[#allocation10 + $0x68] sm:$0xff]
    %v158 = vld [vmem:[#allocation10 + $0x70] sm:$0xff]
    %v159 = vld [vmem:[#allocation10 + $0x78] sm:$0xff]
    %160 = vmatprep.subr.mxu0 0.0
    %161 = vmatpush1.msra.mxu0 %v144
    %162 = vmatprep.subr.mxu0 0.0
    %163 = vmatpush1.msra.mxu0 %v145
    %164 = vmatprep.subr.mxu0 0.0
    %165 = vmatpush1.msra.mxu0 %v146
    %166 = vmatprep.subr.mxu0 0.0
    %167 = vmatpush1.msra.mxu0 %v147
    %168 = vmatprep.subr.mxu0 0.0
    %169 = vmatpush1.msra.mxu0 %v148
    %170 = vmatprep.subr.mxu0 0.0
    %171 = vmatpush1.msra.mxu0 %v149
    %172 = vmatprep.subr.mxu0 0.0
    %173 = vmatpush1.msra.mxu0 %v150
    %174 = vmatprep.subr.mxu0 0.0
    %175 = vmatpush1.msra.mxu0 %v151
    %176 = vmatprep.subr.mxu0 0.0
    %177 = vmatpush1.msra.mxu0 %v152
    %178 = vmatprep.subr.mxu0 0.0
    %179 = vmatpush1.msra.mxu0 %v153
    %180 = vmatprep.subr.mxu0 0.0
    %181 = vmatpush1.msra.mxu0 %v154
    %182 = vmatprep.subr.mxu0 0.0
    %183 = vmatpush1.msra.mxu0 %v155
    %184 = vmatprep.subr.mxu0 0.0
    %185 = vmatpush1.msra.mxu0 %v156
    %186 = vmatprep.subr.mxu0 0.0
    %187 = vmatpush1.msra.mxu0 %v157
    %188 = vmatprep.subr.mxu0 0.0
    %189 = vmatpush1.msra.mxu0 %v158
    %190 = vmatprep.subr.mxu0 0.0
    %191 = vmatpush1.msra.mxu0 %v159
    %192 = vmatprep.subr.mxu0 0.0
    %193 = vmatpush1.msra.mxu0 0.0
    %194 = vmatprep.subr.mxu0 0.0
    %195 = vmatpush1.msra.mxu0 0.0
    %196 = vmatprep.subr.mxu0 0.0
    %197 = vmatpush1.msra.mxu0 0.0
    %198 = vmatprep.subr.mxu0 0.0
    %199 = vmatpush1.msra.mxu0 0.0
    %200 = vmatprep.subr.mxu0 0.0
    %201 = vmatpush1.msra.mxu0 0.0
    %202 = vmatprep.subr.mxu0 0.0
    %203 = vmatpush1.msra.mxu0 0.0
    %204 = vmatprep.subr.mxu0 0.0
    %205 = vmatpush1.msra.mxu0 0.0
    %206 = vmatprep.subr.mxu0 0.0
    %207 = vmatpush1.msra.mxu0 0.0
    %208 = vmatprep.subr.mxu0 0.0
    %209 = vmatpush1.msra.mxu0 0.0
    %210 = vmatprep.subr.mxu0 0.0
    %211 = vmatpush1.msra.mxu0 0.0
    %212 = vmatprep.subr.mxu0 0.0
    %213 = vmatpush1.msra.mxu0 0.0
    %214 = vmatprep.subr.mxu0 0.0
    %215 = vmatpush1.msra.mxu0 0.0
    %216 = vmatprep.subr.mxu0 0.0
    %217 = vmatpush1.msra.mxu0 0.0
    %218 = vmatprep.subr.mxu0 0.0
    %219 = vmatpush1.msra.mxu0 0.0
    %220 = vmatprep.subr.mxu0 0.0
    %221 = vmatpush1.msra.mxu0 0.0
    %222 = vmatprep.subr.mxu0 0.0
    %223 = vmatpush1.msra.mxu0 0.0
    %224 = vmatprep.mubr.f32.mxu0 0.0
    %225 = vmatmul.mubr.f32.gmra.mrb[0].mxu0 %v128
    %v226 = vpop.f32.mrb[0].mxu0
    %v227 = vadd.f32 0.0, %v226
    %v228 = vpop.f32.mrb[0].mxu0
    %229 = vmatprep.mubr.f32.mxu0 0.0
    %230 = vmatmul.mubr.f32.gmra.mrb[0].mxu0 %v129
    %v231 = vpop.f32.mrb[0].mxu0
    %v232 = vadd.f32 0.0, %v231
    %v233 = vpop.f32.mrb[0].mxu0
    %234 = vmatprep.mubr.f32.mxu0 0.0
    %235 = vmatmul.mubr.f32.gmra.mrb[0].mxu0 %v130
    %v236 = vpop.f32.mrb[0].mxu0
    %v237 = vadd.f32 0.0, %v236
    %v238 = vpop.f32.mrb[0].mxu0
    %239 = vmatprep.mubr.f32.mxu0 0.0
    %240 = vmatmul.mubr.f32.gmra.mrb[0].mxu0 %v131
    %v241 = vpop.f32.mrb[0].mxu0
    %v242 = vadd.f32 0.0, %v241
    %v243 = vpop.f32.mrb[0].mxu0
    %244 = vmatprep.mubr.f32.mxu0 0.0
    %245 = vmatmul.mubr.f32.gmra.mrb[0].mxu0 %v132
    %v246 = vpop.f32.mrb[0].mxu0
    %v247 = vadd.f32 0.0, %v246
    %v248 = vpop.f32.mrb[0].mxu0
    %249 = vmatprep.mubr.f32.mxu0 0.0
    %250 = vmatmul.mubr.f32.gmra.mrb[0].mxu0 %v133
    %v251 = vpop.f32.mrb[0].mxu0
    %v252 = vadd.f32 0.0, %v251
    %v253 = vpop.f32.mrb[0].mxu0
    %254 = vmatprep.mubr.f32.mxu0 0.0
    %255 = vmatmul.mubr.f32.gmra.mrb[0].mxu0 %v134
    %v256 = vpop.f32.mrb[0].mxu0
    %v257 = vadd.f32 0.0, %v256
    %v258 = vpop.f32.mrb[0].mxu0
    %259 = vmatprep.mubr.f32.mxu0 0.0
    %260 = vmatmul.mubr.f32.gmra.mrb[0].mxu0 %v135
    %v261 = vpop.f32.mrb[0].mxu0
    %v262 = vadd.f32 0.0, %v261
    %v263 = vpop.f32.mrb[0].mxu0
    %264 = vmatprep.mubr.f32.mxu0 0.0
    %265 = vmatmul.mubr.f32.gmra.mrb[0].mxu0 %v136
    %v266 = vpop.f32.mrb[0].mxu0
    %v267 = vadd.f32 0.0, %v266
    %v268 = vpop.f32.mrb[0].mxu0
    %269 = vmatprep.mubr.f32.mxu0 0.0
    %270 = vmatmul.mubr.f32.gmra.mrb[0].mxu0 %v137
    %v271 = vpop.f32.mrb[0].mxu0
    %v272 = vadd.f32 0.0, %v271
    %v273 = vpop.f32.mrb[0].mxu0
    %274 = vmatprep.mubr.f32.mxu0 0.0
    %275 = vmatmul.mubr.f32.gmra.mrb[0].mxu0 %v138
    %v276 = vpop.f32.mrb[0].mxu0
    %v277 = vadd.f32 0.0, %v276
    %v278 = vpop.f32.mrb[0].mxu0
    %279 = vmatprep.mubr.f32.mxu0 0.0
    %280 = vmatmul.mubr.f32.gmra.mrb[0].mxu0 %v139
    %v281 = vpop.f32.mrb[0].mxu0
    %v282 = vadd.f32 0.0, %v281
    %v283 = vpop.f32.mrb[0].mxu0
    %284 = vmatprep.mubr.f32.mxu0 0.0
    %285 = vmatmul.mubr.f32.gmra.mrb[0].mxu0 %v140
    %v286 = vpop.f32.mrb[0].mxu0
    %v287 = vadd.f32 0.0, %v286
    %v288 = vpop.f32.mrb[0].mxu0
    %289 = vmatprep.mubr.f32.mxu0 0.0
    %290 = vmatmul.mubr.f32.gmra.mrb[0].mxu0 %v141
    %v291 = vpop.f32.mrb[0].mxu0
    %v292 = vadd.f32 0.0, %v291
    %v293 = vpop.f32.mrb[0].mxu0
    %294 = vmatprep.mubr.f32.mxu0 0.0
    %295 = vmatmul.mubr.f32.gmra.mrb[0].mxu0 %v142
    %v296 = vpop.f32.mrb[0].mxu0
    %v297 = vadd.f32 0.0, %v296
    %v298 = vpop.f32.mrb[0].mxu0
    %299 = vmatprep.mubr.f32.mxu0 0.0
    %300 = vmatmul.mubr.f32.gmra.mrb[0].mxu0 %v143
    %v301 = vpop.f32.mrb[0].mxu0
    %v302 = vadd.f32 0.0, %v301
    %v303 = vpop.f32.mrb[0].mxu0
    %304 = vdwg.mxu0
    %v305 = vmax.f32 %v227, 0.0
    %v306 = vmax.f32 %v232, 0.0
    %v307 = vmax.f32 %v237, 0.0
    %v308 = vmax.f32 %v242, 0.0
    %v309 = vmax.f32 %v247, 0.0
    %v310 = vmax.f32 %v252, 0.0
    %v311 = vmax.f32 %v257, 0.0
    %v312 = vmax.f32 %v262, 0.0
    %v313 = vmax.f32 %v267, 0.0
    %v314 = vmax.f32 %v272, 0.0
    %v315 = vmax.f32 %v277, 0.0
    %v316 = vmax.f32 %v282, 0.0
    %v317 = vmax.f32 %v287, 0.0
    %v318 = vmax.f32 %v292, 0.0
    %v319 = vmax.f32 %v297, 0.0
    %v320 = vmax.f32 %v302, 0.0
    %v321 = vld [vmem:[#allocation7] sm:$0xff]
    %v322 = vld [vmem:[#allocation7 + $0x8] sm:$0xff]
    %v323 = vld [vmem:[#allocation7 + $0x10] sm:$0xff]
    %v324 = vld [vmem:[#allocation7 + $0x18] sm:$0xff]
    %v325 = vld [vmem:[#allocation7 + $0x20] sm:$0xff]
    %v326 = vld [vmem:[#allocation7 + $0x28] sm:$0xff]
    %v327 = vld [vmem:[#allocation7 + $0x30] sm:$0xff]
    %v328 = vld [vmem:[#allocation7 + $0x38] sm:$0xff]
    %v329 = vld [vmem:[#allocation7 + $0x40] sm:$0xff]
    %v330 = vld [vmem:[#allocation7 + $0x48] sm:$0xff]
    %v331 = vld [vmem:[#allocation7 + $0x50] sm:$0xff]
    %v332 = vld [vmem:[#allocation7 + $0x58] sm:$0xff]
    %v333 = vld [vmem:[#allocation7 + $0x60] sm:$0xff]
    %v334 = vld [vmem:[#allocation7 + $0x68] sm:$0xff]
    %v335 = vld [vmem:[#allocation7 + $0x70] sm:$0xff]
    %v336 = vld [vmem:[#allocation7 + $0x78] sm:$0xff]
    %337 = vmatprep.subr.mxu0 0.0
    %338 = vmatpush1.msra.mxu0 %v305
    %339 = vmatprep.subr.mxu0 0.0
    %340 = vmatpush1.msra.mxu0 %v306
    %341 = vmatprep.subr.mxu0 0.0
    %342 = vmatpush1.msra.mxu0 %v307
    %343 = vmatprep.subr.mxu0 0.0
    %344 = vmatpush1.msra.mxu0 %v308
    %345 = vmatprep.subr.mxu0 0.0
    %346 = vmatpush1.msra.mxu0 %v309
    %347 = vmatprep.subr.mxu0 0.0
    %348 = vmatpush1.msra.mxu0 %v310
    %349 = vmatprep.subr.mxu0 0.0
    %350 = vmatpush1.msra.mxu0 %v311
    %351 = vmatprep.subr.mxu0 0.0
    %352 = vmatpush1.msra.mxu0 %v312
    %353 = vmatprep.subr.mxu0 0.0
    %354 = vmatpush1.msra.mxu0 %v313
    %355 = vmatprep.subr.mxu0 0.0
    %356 = vmatpush1.msra.mxu0 %v314
    %357 = vmatprep.subr.mxu0 0.0
    %358 = vmatpush1.msra.mxu0 %v315
    %359 = vmatprep.subr.mxu0 0.0
    %360 = vmatpush1.msra.mxu0 %v316
    %361 = vmatprep.subr.mxu0 0.0
    %362 = vmatpush1.msra.mxu0 %v317
    %363 = vmatprep.subr.mxu0 0.0
    %364 = vmatpush1.msra.mxu0 %v318
    %365 = vmatprep.subr.mxu0 0.0
    %366 = vmatpush1.msra.mxu0 %v319
    %367 = vmatprep.subr.mxu0 0.0
    %368 = vmatpush1.msra.mxu0 %v320
    %369 = vmatprep.subr.mxu0 0.0
    %370 = vmatpush1.msra.mxu0 0.0
    %371 = vmatprep.subr.mxu0 0.0
    %372 = vmatpush1.msra.mxu0 0.0
    %373 = vmatprep.subr.mxu0 0.0
    %374 = vmatpush1.msra.mxu0 0.0
    %375 = vmatprep.subr.mxu0 0.0
    %376 = vmatpush1.msra.mxu0 0.0
    %377 = vmatprep.subr.mxu0 0.0
    %378 = vmatpush1.msra.mxu0 0.0
    %379 = vmatprep.subr.mxu0 0.0
    %380 = vmatpush1.msra.mxu0 0.0
    %381 = vmatprep.subr.mxu0 0.0
    %382 = vmatpush1.msra.mxu0 0.0
    %383 = vmatprep.subr.mxu0 0.0
    %384 = vmatpush1.msra.mxu0 0.0
    %385 = vmatprep.subr.mxu0 0.0
    %386 = vmatpush1.msra.mxu0 0.0
    %387 = vmatprep.subr.mxu0 0.0
    %388 = vmatpush1.msra.mxu0 0.0
    %389 = vmatprep.subr.mxu0 0.0
    %390 = vmatpush1.msra.mxu0 0.0
    %391 = vmatprep.subr.mxu0 0.0
    %392 = vmatpush1.msra.mxu0 0.0
    %393 = vmatprep.subr.mxu0 0.0
    %394 = vmatpush1.msra.mxu0 0.0
    %395 = vmatprep.subr.mxu0 0.0
    %396 = vmatpush1.msra.mxu0 0.0
    %397 = vmatprep.subr.mxu0 0.0
    %398 = vmatpush1.msra.mxu0 0.0
    %399 = vmatprep.subr.mxu0 0.0
    %400 = vmatpush1.msra.mxu0 0.0
    %401 = vmatprep.mubr.f32.mxu0 0.0
    %402 = vmatmul.mubr.f32.gmra.mrb[0].mxu0 %v321
    %v403 = vpop.f32.mrb[0].mxu0
    %v404 = vadd.f32 0.0, %v403
    %v405 = vpop.f32.mrb[0].mxu0
    %406 = vmatprep.mubr.f32.mxu0 0.0
    %407 = vmatmul.mubr.f32.gmra.mrb[0].mxu0 %v322
    %v408 = vpop.f32.mrb[0].mxu0
    %v409 = vadd.f32 0.0, %v408
    %v410 = vpop.f32.mrb[0].mxu0
    %411 = vmatprep.mubr.f32.mxu0 0.0
    %412 = vmatmul.mubr.f32.gmra.mrb[0].mxu0 %v323
    %v413 = vpop.f32.mrb[0].mxu0
    %v414 = vadd.f32 0.0, %v413
    %v415 = vpop.f32.mrb[0].mxu0
    %416 = vmatprep.mubr.f32.mxu0 0.0
    %417 = vmatmul.mubr.f32.gmra.mrb[0].mxu0 %v324
    %v418 = vpop.f32.mrb[0].mxu0
    %v419 = vadd.f32 0.0, %v418
    %v420 = vpop.f32.mrb[0].mxu0
    %421 = vmatprep.mubr.f32.mxu0 0.0
    %422 = vmatmul.mubr.f32.gmra.mrb[0].mxu0 %v325
    %v423 = vpop.f32.mrb[0].mxu0
    %v424 = vadd.f32 0.0, %v423
    %v425 = vpop.f32.mrb[0].mxu0
    %426 = vmatprep.mubr.f32.mxu0 0.0
    %427 = vmatmul.mubr.f32.gmra.mrb[0].mxu0 %v326
    %v428 = vpop.f32.mrb[0].mxu0
    %v429 = vadd.f32 0.0, %v428
    %v430 = vpop.f32.mrb[0].mxu0
    %431 = vmatprep.mubr.f32.mxu0 0.0
    %432 = vmatmul.mubr.f32.gmra.mrb[0].mxu0 %v327
    %v433 = vpop.f32.mrb[0].mxu0
    %v434 = vadd.f32 0.0, %v433
    %v435 = vpop.f32.mrb[0].mxu0
    %436 = vmatprep.mubr.f32.mxu0 0.0
    %437 = vmatmul.mubr.f32.gmra.mrb[0].mxu0 %v328
    %v438 = vpop.f32.mrb[0].mxu0
    %v439 = vadd.f32 0.0, %v438
    %v440 = vpop.f32.mrb[0].mxu0
    %441 = vmatprep.mubr.f32.mxu0 0.0
    %442 = vmatmul.mubr.f32.gmra.mrb[0].mxu0 %v329
    %v443 = vpop.f32.mrb[0].mxu0
    %v444 = vadd.f32 0.0, %v443
    %v445 = vpop.f32.mrb[0].mxu0
    %446 = vmatprep.mubr.f32.mxu0 0.0
    %447 = vmatmul.mubr.f32.gmra.mrb[0].mxu0 %v330
    %v448 = vpop.f32.mrb[0].mxu0
    %v449 = vadd.f32 0.0, %v448
    %v450 = vpop.f32.mrb[0].mxu0
    %451 = vmatprep.mubr.f32.mxu0 0.0
    %452 = vmatmul.mubr.f32.gmra.mrb[0].mxu0 %v331
    %v453 = vpop.f32.mrb[0].mxu0
    %v454 = vadd.f32 0.0, %v453
    %v455 = vpop.f32.mrb[0].mxu0
    %456 = vmatprep.mubr.f32.mxu0 0.0
    %457 = vmatmul.mubr.f32.gmra.mrb[0].mxu0 %v332
    %v458 = vpop.f32.mrb[0].mxu0
    %v459 = vadd.f32 0.0, %v458
    %v460 = vpop.f32.mrb[0].mxu0
    %461 = vmatprep.mubr.f32.mxu0 0.0
    %462 = vmatmul.mubr.f32.gmra.mrb[0].mxu0 %v333
    %v463 = vpop.f32.mrb[0].mxu0
    %v464 = vadd.f32 0.0, %v463
    %v465 = vpop.f32.mrb[0].mxu0
    %466 = vmatprep.mubr.f32.mxu0 0.0
    %467 = vmatmul.mubr.f32.gmra.mrb[0].mxu0 %v334
    %v468 = vpop.f32.mrb[0].mxu0
    %v469 = vadd.f32 0.0, %v468
    %v470 = vpop.f32.mrb[0].mxu0
    %471 = vmatprep.mubr.f32.mxu0 0.0
    %472 = vmatmul.mubr.f32.gmra.mrb[0].mxu0 %v335
    %v473 = vpop.f32.mrb[0].mxu0
    %v474 = vadd.f32 0.0, %v473
    %v475 = vpop.f32.mrb[0].mxu0
    %476 = vmatprep.mubr.f32.mxu0 0.0
    %477 = vmatmul.mubr.f32.gmra.mrb[0].mxu0 %v336
    %v478 = vpop.f32.mrb[0].mxu0
    %v479 = vadd.f32 0.0, %v478
    %v480 = vpop.f32.mrb[0].mxu0
    %481 = vdwg.mxu0
    %v482 = vld [vmem:[#allocation11] sm:$0xff]
    %v483 = vld [vmem:[#allocation11 + $0x8] sm:$0xff]
    %v484 = vld [vmem:[#allocation11 + $0x10] sm:$0xff]
    %v485 = vld [vmem:[#allocation11 + $0x18] sm:$0xff]
    %v486 = vld [vmem:[#allocation11 + $0x20] sm:$0xff]
    %v487 = vld [vmem:[#allocation11 + $0x28] sm:$0xff]
    %v488 = vld [vmem:[#allocation11 + $0x30] sm:$0xff]
    %v489 = vld [vmem:[#allocation11 + $0x38] sm:$0xff]
    %v490 = vld [vmem:[#allocation11 + $0x40] sm:$0xff]
    %v491 = vld [vmem:[#allocation11 + $0x48] sm:$0xff]
    %v492 = vld [vmem:[#allocation11 + $0x50] sm:$0xff]
    %v493 = vld [vmem:[#allocation11 + $0x58] sm:$0xff]
    %v494 = vld [vmem:[#allocation11 + $0x60] sm:$0xff]
    %v495 = vld [vmem:[#allocation11 + $0x68] sm:$0xff]
    %v496 = vld [vmem:[#allocation11 + $0x70] sm:$0xff]
    %v497 = vld [vmem:[#allocation11 + $0x78] sm:$0xff]
    %498 = vmatprep.subr.mxu0 0.0
    %499 = vmatpush1.msra.mxu0 %v482
    %500 = vmatprep.subr.mxu0 0.0
    %501 = vmatpush1.msra.mxu0 %v483
    %502 = vmatprep.subr.mxu0 0.0
    %503 = vmatpush1.msra.mxu0 %v484
    %504 = vmatprep.subr.mxu0 0.0
    %505 = vmatpush1.msra.mxu0 %v485
    %506 = vmatprep.subr.mxu0 0.0
    %507 = vmatpush1.msra.mxu0 %v486
    %508 = vmatprep.subr.mxu0 0.0
    %509 = vmatpush1.msra.mxu0 %v487
    %510 = vmatprep.subr.mxu0 0.0
    %511 = vmatpush1.msra.mxu0 %v488
    %512 = vmatprep.subr.mxu0 0.0
    %513 = vmatpush1.msra.mxu0 %v489
    %514 = vmatprep.subr.mxu0 0.0
    %515 = vmatpush1.msra.mxu0 %v490
    %516 = vmatprep.subr.mxu0 0.0
    %517 = vmatpush1.msra.mxu0 %v491
    %518 = vmatprep.subr.mxu0 0.0
    %519 = vmatpush1.msra.mxu0 %v492
    %520 = vmatprep.subr.mxu0 0.0
    %521 = vmatpush1.msra.mxu0 %v493
    %522 = vmatprep.subr.mxu0 0.0
    %523 = vmatpush1.msra.mxu0 %v494
    %524 = vmatprep.subr.mxu0 0.0
    %525 = vmatpush1.msra.mxu0 %v495
    %526 = vmatprep.subr.mxu0 0.0
    %527 = vmatpush1.msra.mxu0 %v496
    %528 = vmatprep.subr.mxu0 0.0
    %529 = vmatpush1.msra.mxu0 %v497
    %530 = vmatprep.subr.mxu0 0.0
    %531 = vmatpush1.msra.mxu0 0.0
    %532 = vmatprep.subr.mxu0 0.0
    %533 = vmatpush1.msra.mxu0 0.0
    %534 = vmatprep.subr.mxu0 0.0
    %535 = vmatpush1.msra.mxu0 0.0
    %536 = vmatprep.subr.mxu0 0.0
    %537 = vmatpush1.msra.mxu0 0.0
    %538 = vmatprep.subr.mxu0 0.0
    %539 = vmatpush1.msra.mxu0 0.0
    %540 = vmatprep.subr.mxu0 0.0
    %541 = vmatpush1.msra.mxu0 0.0
    %542 = vmatprep.subr.mxu0 0.0
    %543 = vmatpush1.msra.mxu0 0.0
    %544 = vmatprep.subr.mxu0 0.0
    %545 = vmatpush1.msra.mxu0 0.0
    %546 = vmatprep.subr.mxu0 0.0
    %547 = vmatpush1.msra.mxu0 0.0
    %548 = vmatprep.subr.mxu0 0.0
    %549 = vmatpush1.msra.mxu0 0.0
    %550 = vmatprep.subr.mxu0 0.0
    %551 = vmatpush1.msra.mxu0 0.0
    %552 = vmatprep.subr.mxu0 0.0
    %553 = vmatpush1.msra.mxu0 0.0
    %554 = vmatprep.subr.mxu0 0.0
    %555 = vmatpush1.msra.mxu0 0.0
    %556 = vmatprep.subr.mxu0 0.0
    %557 = vmatpush1.msra.mxu0 0.0
    %558 = vmatprep.subr.mxu0 0.0
    %559 = vmatpush1.msra.mxu0 0.0
    %560 = vmatprep.subr.mxu0 0.0
    %561 = vmatpush1.msra.mxu0 0.0
    %562 = vmatprep.mubr.f32.mxu0 0.0
    %563 = vmatmul.mubr.f32.gmra.mrb[0].mxu0 %v404
    %v564 = vpop.f32.mrb[0].mxu0
    %v565 = vadd.f32 0.0, %v564
    %v566 = vpop.f32.mrb[0].mxu0
    %567 = vmatprep.mubr.f32.mxu0 0.0
    %568 = vmatmul.mubr.f32.gmra.mrb[0].mxu0 %v409
    %v569 = vpop.f32.mrb[0].mxu0
    %v570 = vadd.f32 0.0, %v569
    %v571 = vpop.f32.mrb[0].mxu0
    %572 = vmatprep.mubr.f32.mxu0 0.0
    %573 = vmatmul.mubr.f32.gmra.mrb[0].mxu0 %v414
    %v574 = vpop.f32.mrb[0].mxu0
    %v575 = vadd.f32 0.0, %v574
    %v576 = vpop.f32.mrb[0].mxu0
    %577 = vmatprep.mubr.f32.mxu0 0.0
    %578 = vmatmul.mubr.f32.gmra.mrb[0].mxu0 %v419
    %v579 = vpop.f32.mrb[0].mxu0
    %v580 = vadd.f32 0.0, %v579
    %v581 = vpop.f32.mrb[0].mxu0
    %582 = vmatprep.mubr.f32.mxu0 0.0
    %583 = vmatmul.mubr.f32.gmra.mrb[0].mxu0 %v424
    %v584 = vpop.f32.mrb[0].mxu0
    %v585 = vadd.f32 0.0, %v584
    %v586 = vpop.f32.mrb[0].mxu0
    %587 = vmatprep.mubr.f32.mxu0 0.0
    %588 = vmatmul.mubr.f32.gmra.mrb[0].mxu0 %v429
    %v589 = vpop.f32.mrb[0].mxu0
    %v590 = vadd.f32 0.0, %v589
    %v591 = vpop.f32.mrb[0].mxu0
    %592 = vmatprep.mubr.f32.mxu0 0.0
    %593 = vmatmul.mubr.f32.gmra.mrb[0].mxu0 %v434
    %v594 = vpop.f32.mrb[0].mxu0
    %v595 = vadd.f32 0.0, %v594
    %v596 = vpop.f32.mrb[0].mxu0
    %597 = vmatprep.mubr.f32.mxu0 0.0
    %598 = vmatmul.mubr.f32.gmra.mrb[0].mxu0 %v439
    %v599 = vpop.f32.mrb[0].mxu0
    %v600 = vadd.f32 0.0, %v599
    %v601 = vpop.f32.mrb[0].mxu0
    %602 = vmatprep.mubr.f32.mxu0 0.0
    %603 = vmatmul.mubr.f32.gmra.mrb[0].mxu0 %v444
    %v604 = vpop.f32.mrb[0].mxu0
    %v605 = vadd.f32 0.0, %v604
    %v606 = vpop.f32.mrb[0].mxu0
    %607 = vmatprep.mubr.f32.mxu0 0.0
    %608 = vmatmul.mubr.f32.gmra.mrb[0].mxu0 %v449
    %v609 = vpop.f32.mrb[0].mxu0
    %v610 = vadd.f32 0.0, %v609
    %v611 = vpop.f32.mrb[0].mxu0
    %612 = vmatprep.mubr.f32.mxu0 0.0
    %613 = vmatmul.mubr.f32.gmra.mrb[0].mxu0 %v454
    %v614 = vpop.f32.mrb[0].mxu0
    %v615 = vadd.f32 0.0, %v614
    %v616 = vpop.f32.mrb[0].mxu0
    %617 = vmatprep.mubr.f32.mxu0 0.0
    %618 = vmatmul.mubr.f32.gmra.mrb[0].mxu0 %v459
    %v619 = vpop.f32.mrb[0].mxu0
    %v620 = vadd.f32 0.0, %v619
    %v621 = vpop.f32.mrb[0].mxu0
    %622 = vmatprep.mubr.f32.mxu0 0.0
    %623 = vmatmul.mubr.f32.gmra.mrb[0].mxu0 %v464
    %v624 = vpop.f32.mrb[0].mxu0
    %v625 = vadd.f32 0.0, %v624
    %v626 = vpop.f32.mrb[0].mxu0
    %627 = vmatprep.mubr.f32.mxu0 0.0
    %628 = vmatmul.mubr.f32.gmra.mrb[0].mxu0 %v469
    %v629 = vpop.f32.mrb[0].mxu0
    %v630 = vadd.f32 0.0, %v629
    %v631 = vpop.f32.mrb[0].mxu0
    %632 = vmatprep.mubr.f32.mxu0 0.0
    %633 = vmatmul.mubr.f32.gmra.mrb[0].mxu0 %v474
    %v634 = vpop.f32.mrb[0].mxu0
    %v635 = vadd.f32 0.0, %v634
    %v636 = vpop.f32.mrb[0].mxu0
    %637 = vmatprep.mubr.f32.mxu0 0.0
    %638 = vmatmul.mubr.f32.gmra.mrb[0].mxu0 %v479
    %v639 = vpop.f32.mrb[0].mxu0
    %v640 = vadd.f32 0.0, %v639
    %v641 = vpop.f32.mrb[0].mxu0
    %642 = vdwg.mxu0
    %v643 = vadd.f32 %v227, %v565
    %v644 = vadd.f32 %v232, %v570
    %v645 = vadd.f32 %v237, %v575
    %v646 = vadd.f32 %v242, %v580
    %v647 = vadd.f32 %v247, %v585
    %v648 = vadd.f32 %v252, %v590
    %v649 = vadd.f32 %v257, %v595
    %v650 = vadd.f32 %v262, %v600
    %v651 = vadd.f32 %v267, %v605
    %v652 = vadd.f32 %v272, %v610
    %v653 = vadd.f32 %v277, %v615
    %v654 = vadd.f32 %v282, %v620
    %v655 = vadd.f32 %v287, %v625
    %v656 = vadd.f32 %v292, %v630
    %v657 = vadd.f32 %v297, %v635
    %v658 = vadd.f32 %v302, %v640
    %v659 = vmax.f32 %v643, 0.0
    %v660 = vmax.f32 %v644, 0.0
    %v661 = vmax.f32 %v645, 0.0
    %v662 = vmax.f32 %v646, 0.0
    %v663 = vmax.f32 %v647, 0.0
    %v664 = vmax.f32 %v648, 0.0
    %v665 = vmax.f32 %v649, 0.0
    %v666 = vmax.f32 %v650, 0.0
    %v667 = vmax.f32 %v651, 0.0
    %v668 = vmax.f32 %v652, 0.0
    %v669 = vmax.f32 %v653, 0.0
    %v670 = vmax.f32 %v654, 0.0
    %v671 = vmax.f32 %v655, 0.0
    %v672 = vmax.f32 %v656, 0.0
    %v673 = vmax.f32 %v657, 0.0
    %v674 = vmax.f32 %v658, 0.0
    %675 = vmatprep.subr.mxu0 0.0
    %676 = vmatpush1.msra.mxu0 %v659
    %677 = vmatprep.subr.mxu0 0.0
    %678 = vmatpush1.msra.mxu0 %v660
    %679 = vmatprep.subr.mxu0 0.0
    %680 = vmatpush1.msra.mxu0 %v661
    %681 = vmatprep.subr.mxu0 0.0
    %682 = vmatpush1.msra.mxu0 %v662
    %683 = vmatprep.subr.mxu0 0.0
    %684 = vmatpush1.msra.mxu0 %v663
    %685 = vmatprep.subr.mxu0 0.0
    %686 = vmatpush1.msra.mxu0 %v664
    %687 = vmatprep.subr.mxu0 0.0
    %688 = vmatpush1.msra.mxu0 %v665
    %689 = vmatprep.subr.mxu0 0.0
    %690 = vmatpush1.msra.mxu0 %v666
    %691 = vmatprep.subr.mxu0 0.0
    %692 = vmatpush1.msra.mxu0 %v667
    %693 = vmatprep.subr.mxu0 0.0
    %694 = vmatpush1.msra.mxu0 %v668
    %695 = vmatprep.subr.mxu0 0.0
    %696 = vmatpush1.msra.mxu0 %v669
    %697 = vmatprep.subr.mxu0 0.0
    %698 = vmatpush1.msra.mxu0 %v670
    %699 = vmatprep.subr.mxu0 0.0
    %700 = vmatpush1.msra.mxu0 %v671
    %701 = vmatprep.subr.mxu0 0.0
    %702 = vmatpush1.msra.mxu0 %v672
    %703 = vmatprep.subr.mxu0 0.0
    %704 = vmatpush1.msra.mxu0 %v673
    %705 = vmatprep.subr.mxu0 0.0
    %706 = vmatpush1.msra.mxu0 %v674
    %707 = vmatprep.subr.mxu0 0.0
    %708 = vmatpush1.msra.mxu0 0.0
    %709 = vmatprep.subr.mxu0 0.0
    %710 = vmatpush1.msra.mxu0 0.0
    %711 = vmatprep.subr.mxu0 0.0
    %712 = vmatpush1.msra.mxu0 0.0
    %713 = vmatprep.subr.mxu0 0.0
    %714 = vmatpush1.msra.mxu0 0.0
    %715 = vmatprep.subr.mxu0 0.0
    %716 = vmatpush1.msra.mxu0 0.0
    %717 = vmatprep.subr.mxu0 0.0
    %718 = vmatpush1.msra.mxu0 0.0
    %719 = vmatprep.subr.mxu0 0.0
    %720 = vmatpush1.msra.mxu0 0.0
    %721 = vmatprep.subr.mxu0 0.0
    %722 = vmatpush1.msra.mxu0 0.0
    %723 = vmatprep.subr.mxu0 0.0
    %724 = vmatpush1.msra.mxu0 0.0
    %725 = vmatprep.subr.mxu0 0.0
    %726 = vmatpush1.msra.mxu0 0.0
    %727 = vmatprep.subr.mxu0 0.0
    %728 = vmatpush1.msra.mxu0 0.0
    %729 = vmatprep.subr.mxu0 0.0
    %730 = vmatpush1.msra.mxu0 0.0
    %731 = vmatprep.subr.mxu0 0.0
    %732 = vmatpush1.msra.mxu0 0.0
    %733 = vmatprep.subr.mxu0 0.0
    %734 = vmatpush1.msra.mxu0 0.0
    %735 = vmatprep.subr.mxu0 0.0
    %736 = vmatpush1.msra.mxu0 0.0
    %737 = vmatprep.subr.mxu0 0.0
    %738 = vmatpush1.msra.mxu0 0.0
    %739 = vmatprep.mubr.f32.mxu0 0.0
    %740 = vmatmul.mubr.f32.gmra.mrb[0].mxu0 %v321
    %v741 = vpop.f32.mrb[0].mxu0
    %v742 = vadd.f32 0.0, %v741
    %v743 = vpop.f32.mrb[0].mxu0
    %744 = vmatprep.mubr.f32.mxu0 0.0
    %745 = vmatmul.mubr.f32.gmra.mrb[0].mxu0 %v322
    %v746 = vpop.f32.mrb[0].mxu0
    %v747 = vadd.f32 0.0, %v746
    %v748 = vpop.f32.mrb[0].mxu0
    %749 = vmatprep.mubr.f32.mxu0 0.0
    %750 = vmatmul.mubr.f32.gmra.mrb[0].mxu0 %v323
    %v751 = vpop.f32.mrb[0].mxu0
    %v752 = vadd.f32 0.0, %v751
    %v753 = vpop.f32.mrb[0].mxu0
    %754 = vmatprep.mubr.f32.mxu0 0.0
    %755 = vmatmul.mubr.f32.gmra.mrb[0].mxu0 %v324
    %v756 = vpop.f32.mrb[0].mxu0
    %v757 = vadd.f32 0.0, %v756
    %v758 = vpop.f32.mrb[0].mxu0
    %759 = vmatprep.mubr.f32.mxu0 0.0
    %760 = vmatmul.mubr.f32.gmra.mrb[0].mxu0 %v325
    %v761 = vpop.f32.mrb[0].mxu0
    %v762 = vadd.f32 0.0, %v761
    %v763 = vpop.f32.mrb[0].mxu0
    %764 = vmatprep.mubr.f32.mxu0 0.0
    %765 = vmatmul.mubr.f32.gmra.mrb[0].mxu0 %v326
    %v766 = vpop.f32.mrb[0].mxu0
    %v767 = vadd.f32 0.0, %v766
    %v768 = vpop.f32.mrb[0].mxu0
    %769 = vmatprep.mubr.f32.mxu0 0.0
    %770 = vmatmul.mubr.f32.gmra.mrb[0].mxu0 %v327
    %v771 = vpop.f32.mrb[0].mxu0
    %v772 = vadd.f32 0.0, %v771
    %v773 = vpop.f32.mrb[0].mxu0
    %774 = vmatprep.mubr.f32.mxu0 0.0
    %775 = vmatmul.mubr.f32.gmra.mrb[0].mxu0 %v328
    %v776 = vpop.f32.mrb[0].mxu0
    %v777 = vadd.f32 0.0, %v776
    %v778 = vpop.f32.mrb[0].mxu0
    %779 = vmatprep.mubr.f32.mxu0 0.0
    %780 = vmatmul.mubr.f32.gmra.mrb[0].mxu0 %v329
    %v781 = vpop.f32.mrb[0].mxu0
    %v782 = vadd.f32 0.0, %v781
    %v783 = vpop.f32.mrb[0].mxu0
    %784 = vmatprep.mubr.f32.mxu0 0.0
    %785 = vmatmul.mubr.f32.gmra.mrb[0].mxu0 %v330
    %v786 = vpop.f32.mrb[0].mxu0
    %v787 = vadd.f32 0.0, %v786
    %v788 = vpop.f32.mrb[0].mxu0
    %789 = vmatprep.mubr.f32.mxu0 0.0
    %790 = vmatmul.mubr.f32.gmra.mrb[0].mxu0 %v331
    %v791 = vpop.f32.mrb[0].mxu0
    %v792 = vadd.f32 0.0, %v791
    %v793 = vpop.f32.mrb[0].mxu0
    %794 = vmatprep.mubr.f32.mxu0 0.0
    %795 = vmatmul.mubr.f32.gmra.mrb[0].mxu0 %v332
    %v796 = vpop.f32.mrb[0].mxu0
    %v797 = vadd.f32 0.0, %v796
    %v798 = vpop.f32.mrb[0].mxu0
    %799 = vmatprep.mubr.f32.mxu0 0.0
    %800 = vmatmul.mubr.f32.gmra.mrb[0].mxu0 %v333
    %v801 = vpop.f32.mrb[0].mxu0
    %v802 = vadd.f32 0.0, %v801
    %v803 = vpop.f32.mrb[0].mxu0
    %804 = vmatprep.mubr.f32.mxu0 0.0
    %805 = vmatmul.mubr.f32.gmra.mrb[0].mxu0 %v334
    %v806 = vpop.f32.mrb[0].mxu0
    %v807 = vadd.f32 0.0, %v806
    %v808 = vpop.f32.mrb[0].mxu0
    %809 = vmatprep.mubr.f32.mxu0 0.0
    %810 = vmatmul.mubr.f32.gmra.mrb[0].mxu0 %v335
    %v811 = vpop.f32.mrb[0].mxu0
    %v812 = vadd.f32 0.0, %v811
    %v813 = vpop.f32.mrb[0].mxu0
    %814 = vmatprep.mubr.f32.mxu0 0.0
    %815 = vmatmul.mubr.f32.gmra.mrb[0].mxu0 %v336
    %v816 = vpop.f32.mrb[0].mxu0
    %v817 = vadd.f32 0.0, %v816
    %v818 = vpop.f32.mrb[0].mxu0
    %819 = vdwg.mxu0
    %820 = vmatprep.subr.mxu0 0.0
    %821 = vmatpush1.msra.mxu0 %v482
    %822 = vmatprep.subr.mxu0 0.0
    %823 = vmatpush1.msra.mxu0 %v483
    %824 = vmatprep.subr.mxu0 0.0
    %825 = vmatpush1.msra.mxu0 %v484
    %826 = vmatprep.subr.mxu0 0.0
    %827 = vmatpush1.msra.mxu0 %v485
    %828 = vmatprep.subr.mxu0 0.0
    %829 = vmatpush1.msra.mxu0 %v486
    %830 = vmatprep.subr.mxu0 0.0
    %831 = vmatpush1.msra.mxu0 %v487
    %832 = vmatprep.subr.mxu0 0.0
    %833 = vmatpush1.msra.mxu0 %v488
    %834 = vmatprep.subr.mxu0 0.0
    %835 = vmatpush1.msra.mxu0 %v489
    %836 = vmatprep.subr.mxu0 0.0
    %837 = vmatpush1.msra.mxu0 %v490
    %838 = vmatprep.subr.mxu0 0.0
    %839 = vmatpush1.msra.mxu0 %v491
    %840 = vmatprep.subr.mxu0 0.0
    %841 = vmatpush1.msra.mxu0 %v492
    %842 = vmatprep.subr.mxu0 0.0
    %843 = vmatpush1.msra.mxu0 %v493
    %844 = vmatprep.subr.mxu0 0.0
    %845 = vmatpush1.msra.mxu0 %v494
    %846 = vmatprep.subr.mxu0 0.0
    %847 = vmatpush1.msra.mxu0 %v495
    %848 = vmatprep.subr.mxu0 0.0
    %849 = vmatpush1.msra.mxu0 %v496
    %850 = vmatprep.subr.mxu0 0.0
    %851 = vmatpush1.msra.mxu0 %v497
    %852 = vmatprep.subr.mxu0 0.0
    %853 = vmatpush1.msra.mxu0 0.0
    %854 = vmatprep.subr.mxu0 0.0
    %855 = vmatpush1.msra.mxu0 0.0
    %856 = vmatprep.subr.mxu0 0.0
    %857 = vmatpush1.msra.mxu0 0.0
    %858 = vmatprep.subr.mxu0 0.0
    %859 = vmatpush1.msra.mxu0 0.0
    %860 = vmatprep.subr.mxu0 0.0
    %861 = vmatpush1.msra.mxu0 0.0
    %862 = vmatprep.subr.mxu0 0.0
    %863 = vmatpush1.msra.mxu0 0.0
    %864 = vmatprep.subr.mxu0 0.0
    %865 = vmatpush1.msra.mxu0 0.0
    %866 = vmatprep.subr.mxu0 0.0
    %867 = vmatpush1.msra.mxu0 0.0
    %868 = vmatprep.subr.mxu0 0.0
    %869 = vmatpush1.msra.mxu0 0.0
    %870 = vmatprep.subr.mxu0 0.0
    %871 = vmatpush1.msra.mxu0 0.0
    %872 = vmatprep.subr.mxu0 0.0
    %873 = vmatpush1.msra.mxu0 0.0
    %874 = vmatprep.subr.mxu0 0.0
    %875 = vmatpush1.msra.mxu0 0.0
    %876 = vmatprep.subr.mxu0 0.0
    %877 = vmatpush1.msra.mxu0 0.0
    %878 = vmatprep.subr.mxu0 0.0
    %879 = vmatpush1.msra.mxu0 0.0
    %880 = vmatprep.subr.mxu0 0.0
    %881 = vmatpush1.msra.mxu0 0.0
    %882 = vmatprep.subr.mxu0 0.0
    %883 = vmatpush1.msra.mxu0 0.0
    %884 = vmatprep.mubr.f32.mxu0 0.0
    %885 = vmatmul.mubr.f32.gmra.mrb[0].mxu0 %v742
    %v886 = vpop.f32.mrb[0].mxu0
    %v887 = vadd.f32 0.0, %v886
    %v888 = vpop.f32.mrb[0].mxu0
    %889 = vmatprep.mubr.f32.mxu0 0.0
    %890 = vmatmul.mubr.f32.gmra.mrb[0].mxu0 %v747
    %v891 = vpop.f32.mrb[0].mxu0
    %v892 = vadd.f32 0.0, %v891
    %v893 = vpop.f32.mrb[0].mxu0
    %894 = vmatprep.mubr.f32.mxu0 0.0
    %895 = vmatmul.mubr.f32.gmra.mrb[0].mxu0 %v752
    %v896 = vpop.f32.mrb[0].mxu0
    %v897 = vadd.f32 0.0, %v896
    %v898 = vpop.f32.mrb[0].mxu0
    %899 = vmatprep.mubr.f32.mxu0 0.0
    %900 = vmatmul.mubr.f32.gmra.mrb[0].mxu0 %v757
    %v901 = vpop.f32.mrb[0].mxu0
    %v902 = vadd.f32 0.0, %v901
    %v903 = vpop.f32.mrb[0].mxu0
    %904 = vmatprep.mubr.f32.mxu0 0.0
    %905 = vmatmul.mubr.f32.gmra.mrb[0].mxu0 %v762
    %v906 = vpop.f32.mrb[0].mxu0
    %v907 = vadd.f32 0.0, %v906
    %v908 = vpop.f32.mrb[0].mxu0
    %909 = vmatprep.mubr.f32.mxu0 0.0
    %910 = vmatmul.mubr.f32.gmra.mrb[0].mxu0 %v767
    %v911 = vpop.f32.mrb[0].mxu0
    %v912 = vadd.f32 0.0, %v911
    %v913 = vpop.f32.mrb[0].mxu0
    %914 = vmatprep.mubr.f32.mxu0 0.0
    %915 = vmatmul.mubr.f32.gmra.mrb[0].mxu0 %v772
    %v916 = vpop.f32.mrb[0].mxu0
    %v917 = vadd.f32 0.0, %v916
    %v918 = vpop.f32.mrb[0].mxu0
    %919 = vmatprep.mubr.f32.mxu0 0.0
    %920 = vmatmul.mubr.f32.gmra.mrb[0].mxu0 %v777
    %v921 = vpop.f32.mrb[0].mxu0
    %v922 = vadd.f32 0.0, %v921
    %v923 = vpop.f32.mrb[0].mxu0
    %924 = vmatprep.mubr.f32.mxu0 0.0
    %925 = vmatmul.mubr.f32.gmra.mrb[0].mxu0 %v782
    %v926 = vpop.f32.mrb[0].mxu0
    %v927 = vadd.f32 0.0, %v926
    %v928 = vpop.f32.mrb[0].mxu0
    %929 = vmatprep.mubr.f32.mxu0 0.0
    %930 = vmatmul.mubr.f32.gmra.mrb[0].mxu0 %v787
    %v931 = vpop.f32.mrb[0].mxu0
    %v932 = vadd.f32 0.0, %v931
    %v933 = vpop.f32.mrb[0].mxu0
    %934 = vmatprep.mubr.f32.mxu0 0.0
    %935 = vmatmul.mubr.f32.gmra.mrb[0].mxu0 %v792
    %v936 = vpop.f32.mrb[0].mxu0
    %v937 = vadd.f32 0.0, %v936
    %v938 = vpop.f32.mrb[0].mxu0
    %939 = vmatprep.mubr.f32.mxu0 0.0
    %940 = vmatmul.mubr.f32.gmra.mrb[0].mxu0 %v797
    %v941 = vpop.f32.mrb[0].mxu0
    %v942 = vadd.f32 0.0, %v941
    %v943 = vpop.f32.mrb[0].mxu0
    %944 = vmatprep.mubr.f32.mxu0 0.0
    %945 = vmatmul.mubr.f32.gmra.mrb[0].mxu0 %v802
    %v946 = vpop.f32.mrb[0].mxu0
    %v947 = vadd.f32 0.0, %v946
    %v948 = vpop.f32.mrb[0].mxu0
    %949 = vmatprep.mubr.f32.mxu0 0.0
    %950 = vmatmul.mubr.f32.gmra.mrb[0].mxu0 %v807
    %v951 = vpop.f32.mrb[0].mxu0
    %v952 = vadd.f32 0.0, %v951
    %v953 = vpop.f32.mrb[0].mxu0
    %954 = vmatprep.mubr.f32.mxu0 0.0
    %955 = vmatmul.mubr.f32.gmra.mrb[0].mxu0 %v812
    %v956 = vpop.f32.mrb[0].mxu0
    %v957 = vadd.f32 0.0, %v956
    %v958 = vpop.f32.mrb[0].mxu0
    %959 = vmatprep.mubr.f32.mxu0 0.0
    %960 = vmatmul.mubr.f32.gmra.mrb[0].mxu0 %v817
    %v961 = vpop.f32.mrb[0].mxu0
    %v962 = vadd.f32 0.0, %v961
    %v963 = vpop.f32.mrb[0].mxu0
    %964 = vdwg.mxu0
    %v965 = vadd.f32 %v227, %v887
    %v966 = vadd.f32 %v232, %v892
    %v967 = vadd.f32 %v237, %v897
    %v968 = vadd.f32 %v242, %v902
    %v969 = vadd.f32 %v247, %v907
    %v970 = vadd.f32 %v252, %v912
    %v971 = vadd.f32 %v257, %v917
    %v972 = vadd.f32 %v262, %v922
    %v973 = vadd.f32 %v267, %v927
    %v974 = vadd.f32 %v272, %v932
    %v975 = vadd.f32 %v277, %v937
    %v976 = vadd.f32 %v282, %v942
    %v977 = vadd.f32 %v287, %v947
    %v978 = vadd.f32 %v292, %v952
    %v979 = vadd.f32 %v297, %v957
    %v980 = vadd.f32 %v302, %v962
    %v981 = vmax.f32 %v965, 0.0
    %v982 = vmax.f32 %v966, 0.0
    %v983 = vmax.f32 %v967, 0.0
    %v984 = vmax.f32 %v968, 0.0
    %v985 = vmax.f32 %v969, 0.0
    %v986 = vmax.f32 %v970, 0.0
    %v987 = vmax.f32 %v971, 0.0
    %v988 = vmax.f32 %v972, 0.0
    %v989 = vmax.f32 %v973, 0.0
    %v990 = vmax.f32 %v974, 0.0
    %v991 = vmax.f32 %v975, 0.0
    %v992 = vmax.f32 %v976, 0.0
    %v993 = vmax.f32 %v977, 0.0
    %v994 = vmax.f32 %v978, 0.0
    %v995 = vmax.f32 %v979, 0.0
    %v996 = vmax.f32 %v980, 0.0
    %v997 = vld [vmem:[#allocation8] sm:$0xff]
    %v998 = vld [vmem:[#allocation8 + $0x8] sm:$0xff]
    %v999 = vld [vmem:[#allocation8 + $0x10] sm:$0xff]
    %v1000 = vld [vmem:[#allocation8 + $0x18] sm:$0xff]
    %v1001 = vld [vmem:[#allocation8 + $0x20] sm:$0xff]
    %v1002 = vld [vmem:[#allocation8 + $0x28] sm:$0xff]
    %v1003 = vld [vmem:[#allocation8 + $0x30] sm:$0xff]
    %v1004 = vld [vmem:[#allocation8 + $0x38] sm:$0xff]
    %v1005 = vld [vmem:[#allocation8 + $0x40] sm:$0xff]
    %v1006 = vld [vmem:[#allocation8 + $0x48] sm:$0xff]
    %v1007 = vld [vmem:[#allocation8 + $0x50] sm:$0xff]
    %v1008 = vld [vmem:[#allocation8 + $0x58] sm:$0xff]
    %v1009 = vld [vmem:[#allocation8 + $0x60] sm:$0xff]
    %v1010 = vld [vmem:[#allocation8 + $0x68] sm:$0xff]
    %v1011 = vld [vmem:[#allocation8 + $0x70] sm:$0xff]
    %v1012 = vld [vmem:[#allocation8 + $0x78] sm:$0xff]
    %1013 = vmatprep.subr.mxu0 0.0
    %1014 = vmatpush1.msra.mxu0 %v981
    %1015 = vmatprep.subr.mxu0 0.0
    %1016 = vmatpush1.msra.mxu0 %v982
    %1017 = vmatprep.subr.mxu0 0.0
    %1018 = vmatpush1.msra.mxu0 %v983
    %1019 = vmatprep.subr.mxu0 0.0
    %1020 = vmatpush1.msra.mxu0 %v984
    %1021 = vmatprep.subr.mxu0 0.0
    %1022 = vmatpush1.msra.mxu0 %v985
    %1023 = vmatprep.subr.mxu0 0.0
    %1024 = vmatpush1.msra.mxu0 %v986
    %1025 = vmatprep.subr.mxu0 0.0
    %1026 = vmatpush1.msra.mxu0 %v987
    %1027 = vmatprep.subr.mxu0 0.0
    %1028 = vmatpush1.msra.mxu0 %v988
    %1029 = vmatprep.subr.mxu0 0.0
    %1030 = vmatpush1.msra.mxu0 %v989
    %1031 = vmatprep.subr.mxu0 0.0
    %1032 = vmatpush1.msra.mxu0 %v990
    %1033 = vmatprep.subr.mxu0 0.0
    %1034 = vmatpush1.msra.mxu0 %v991
    %1035 = vmatprep.subr.mxu0 0.0
    %1036 = vmatpush1.msra.mxu0 %v992
    %1037 = vmatprep.subr.mxu0 0.0
    %1038 = vmatpush1.msra.mxu0 %v993
    %1039 = vmatprep.subr.mxu0 0.0
    %1040 = vmatpush1.msra.mxu0 %v994
    %1041 = vmatprep.subr.mxu0 0.0
    %1042 = vmatpush1.msra.mxu0 %v995
    %1043 = vmatprep.subr.mxu0 0.0
    %1044 = vmatpush1.msra.mxu0 %v996
    %1045 = vmatprep.subr.mxu0 0.0
    %1046 = vmatpush1.msra.mxu0 0.0
    %1047 = vmatprep.subr.mxu0 0.0
    %1048 = vmatpush1.msra.mxu0 0.0
    %1049 = vmatprep.subr.mxu0 0.0
    %1050 = vmatpush1.msra.mxu0 0.0
    %1051 = vmatprep.subr.mxu0 0.0
    %1052 = vmatpush1.msra.mxu0 0.0
    %1053 = vmatprep.subr.mxu0 0.0
    %1054 = vmatpush1.msra.mxu0 0.0
    %1055 = vmatprep.subr.mxu0 0.0
    %1056 = vmatpush1.msra.mxu0 0.0
    %1057 = vmatprep.subr.mxu0 0.0
    %1058 = vmatpush1.msra.mxu0 0.0
    %1059 = vmatprep.subr.mxu0 0.0
    %1060 = vmatpush1.msra.mxu0 0.0
    %1061 = vmatprep.subr.mxu0 0.0
    %1062 = vmatpush1.msra.mxu0 0.0
    %1063 = vmatprep.subr.mxu0 0.0
    %1064 = vmatpush1.msra.mxu0 0.0
    %1065 = vmatprep.subr.mxu0 0.0
    %1066 = vmatpush1.msra.mxu0 0.0
    %1067 = vmatprep.subr.mxu0 0.0
    %1068 = vmatpush1.msra.mxu0 0.0
    %1069 = vmatprep.subr.mxu0 0.0
    %1070 = vmatpush1.msra.mxu0 0.0
    %1071 = vmatprep.subr.mxu0 0.0
    %1072 = vmatpush1.msra.mxu0 0.0
    %1073 = vmatprep.subr.mxu0 0.0
    %1074 = vmatpush1.msra.mxu0 0.0
    %1075 = vmatprep.subr.mxu0 0.0
    %1076 = vmatpush1.msra.mxu0 0.0
    %1077 = vmatprep.mubr.f32.mxu0 0.0
    %1078 = vmatmul.mubr.f32.gmra.mrb[0].mxu0 %v997
    %v1079 = vpop.f32.mrb[0].mxu0
    %v1080 = vadd.f32 0.0, %v1079
    %v1081 = vpop.f32.mrb[0].mxu0
    %1082 = vmatprep.mubr.f32.mxu0 0.0
    %1083 = vmatmul.mubr.f32.gmra.mrb[0].mxu0 %v998
    %v1084 = vpop.f32.mrb[0].mxu0
    %v1085 = vadd.f32 0.0, %v1084
    %v1086 = vpop.f32.mrb[0].mxu0
    %1087 = vmatprep.mubr.f32.mxu0 0.0
    %1088 = vmatmul.mubr.f32.gmra.mrb[0].mxu0 %v999
    %v1089 = vpop.f32.mrb[0].mxu0
    %v1090 = vadd.f32 0.0, %v1089
    %v1091 = vpop.f32.mrb[0].mxu0
    %1092 = vmatprep.mubr.f32.mxu0 0.0
    %1093 = vmatmul.mubr.f32.gmra.mrb[0].mxu0 %v1000
    %v1094 = vpop.f32.mrb[0].mxu0
    %v1095 = vadd.f32 0.0, %v1094
    %v1096 = vpop.f32.mrb[0].mxu0
    %1097 = vmatprep.mubr.f32.mxu0 0.0
    %1098 = vmatmul.mubr.f32.gmra.mrb[0].mxu0 %v1001
    %v1099 = vpop.f32.mrb[0].mxu0
    %v1100 = vadd.f32 0.0, %v1099
    %v1101 = vpop.f32.mrb[0].mxu0
    %1102 = vmatprep.mubr.f32.mxu0 0.0
    %1103 = vmatmul.mubr.f32.gmra.mrb[0].mxu0 %v1002
    %v1104 = vpop.f32.mrb[0].mxu0
    %v1105 = vadd.f32 0.0, %v1104
    %v1106 = vpop.f32.mrb[0].mxu0
    %1107 = vmatprep.mubr.f32.mxu0 0.0
    %1108 = vmatmul.mubr.f32.gmra.mrb[0].mxu0 %v1003
    %v1109 = vpop.f32.mrb[0].mxu0
    %v1110 = vadd.f32 0.0, %v1109
    %v1111 = vpop.f32.mrb[0].mxu0
    %1112 = vmatprep.mubr.f32.mxu0 0.0
    %1113 = vmatmul.mubr.f32.gmra.mrb[0].mxu0 %v1004
    %v1114 = vpop.f32.mrb[0].mxu0
    %v1115 = vadd.f32 0.0, %v1114
    %v1116 = vpop.f32.mrb[0].mxu0
    %1117 = vmatprep.mubr.f32.mxu0 0.0
    %1118 = vmatmul.mubr.f32.gmra.mrb[0].mxu0 %v1005
    %v1119 = vpop.f32.mrb[0].mxu0
    %v1120 = vadd.f32 0.0, %v1119
    %v1121 = vpop.f32.mrb[0].mxu0
    %1122 = vmatprep.mubr.f32.mxu0 0.0
    %1123 = vmatmul.mubr.f32.gmra.mrb[0].mxu0 %v1006
    %v1124 = vpop.f32.mrb[0].mxu0
    %v1125 = vadd.f32 0.0, %v1124
    %v1126 = vpop.f32.mrb[0].mxu0
    %1127 = vmatprep.mubr.f32.mxu0 0.0
    %1128 = vmatmul.mubr.f32.gmra.mrb[0].mxu0 %v1007
    %v1129 = vpop.f32.mrb[0].mxu0
    %v1130 = vadd.f32 0.0, %v1129
    %v1131 = vpop.f32.mrb[0].mxu0
    %1132 = vmatprep.mubr.f32.mxu0 0.0
    %1133 = vmatmul.mubr.f32.gmra.mrb[0].mxu0 %v1008
    %v1134 = vpop.f32.mrb[0].mxu0
    %v1135 = vadd.f32 0.0, %v1134
    %v1136 = vpop.f32.mrb[0].mxu0
    %1137 = vmatprep.mubr.f32.mxu0 0.0
    %1138 = vmatmul.mubr.f32.gmra.mrb[0].mxu0 %v1009
    %v1139 = vpop.f32.mrb[0].mxu0
    %v1140 = vadd.f32 0.0, %v1139
    %v1141 = vpop.f32.mrb[0].mxu0
    %1142 = vmatprep.mubr.f32.mxu0 0.0
    %1143 = vmatmul.mubr.f32.gmra.mrb[0].mxu0 %v1010
    %v1144 = vpop.f32.mrb[0].mxu0
    %v1145 = vadd.f32 0.0, %v1144
    %v1146 = vpop.f32.mrb[0].mxu0
    %1147 = vmatprep.mubr.f32.mxu0 0.0
    %1148 = vmatmul.mubr.f32.gmra.mrb[0].mxu0 %v1011
    %v1149 = vpop.f32.mrb[0].mxu0
    %v1150 = vadd.f32 0.0, %v1149
    %v1151 = vpop.f32.mrb[0].mxu0
    %1152 = vmatprep.mubr.f32.mxu0 0.0
    %1153 = vmatmul.mubr.f32.gmra.mrb[0].mxu0 %v1012
    %v1154 = vpop.f32.mrb[0].mxu0
    %v1155 = vadd.f32 0.0, %v1154
    %v1156 = vpop.f32.mrb[0].mxu0
    %1157 = vdwg.mxu0
    %v1158 = vld [vmem:[#allocation5] sm:$0xff]
    %v1159 = vld [vmem:[#allocation5 + $0x8] sm:$0xff]
    %v1160 = vld [vmem:[#allocation5 + $0x10] sm:$0xff]
    %v1161 = vld [vmem:[#allocation5 + $0x18] sm:$0xff]
    %v1162 = vld [vmem:[#allocation5 + $0x20] sm:$0xff]
    %v1163 = vld [vmem:[#allocation5 + $0x28] sm:$0xff]
    %v1164 = vld [vmem:[#allocation5 + $0x30] sm:$0xff]
    %v1165 = vld [vmem:[#allocation5 + $0x38] sm:$0xff]
    %v1166 = vld [vmem:[#allocation5 + $0x40] sm:$0xff]
    %v1167 = vld [vmem:[#allocation5 + $0x48] sm:$0xff]
    %v1168 = vld [vmem:[#allocation5 + $0x50] sm:$0xff]
    %v1169 = vld [vmem:[#allocation5 + $0x58] sm:$0xff]
    %v1170 = vld [vmem:[#allocation5 + $0x60] sm:$0xff]
    %v1171 = vld [vmem:[#allocation5 + $0x68] sm:$0xff]
    %v1172 = vld [vmem:[#allocation5 + $0x70] sm:$0xff]
    %v1173 = vld [vmem:[#allocation5 + $0x78] sm:$0xff]
    %v1174 = vld [vmem:[#allocation13] sm:$0xff]
    %v1175 = vld [vmem:[#allocation13 + $0x8] sm:$0xff]
    %v1176 = vld [vmem:[#allocation13 + $0x10] sm:$0xff]
    %v1177 = vld [vmem:[#allocation13 + $0x18] sm:$0xff]
    %v1178 = vld [vmem:[#allocation13 + $0x20] sm:$0xff]
    %v1179 = vld [vmem:[#allocation13 + $0x28] sm:$0xff]
    %v1180 = vld [vmem:[#allocation13 + $0x30] sm:$0xff]
    %v1181 = vld [vmem:[#allocation13 + $0x38] sm:$0xff]
    %v1182 = vld [vmem:[#allocation13 + $0x40] sm:$0xff]
    %v1183 = vld [vmem:[#allocation13 + $0x48] sm:$0xff]
    %v1184 = vld [vmem:[#allocation13 + $0x50] sm:$0xff]
    %v1185 = vld [vmem:[#allocation13 + $0x58] sm:$0xff]
    %v1186 = vld [vmem:[#allocation13 + $0x60] sm:$0xff]
    %v1187 = vld [vmem:[#allocation13 + $0x68] sm:$0xff]
    %v1188 = vld [vmem:[#allocation13 + $0x70] sm:$0xff]
    %v1189 = vld [vmem:[#allocation13 + $0x78] sm:$0xff]
    %v1190 = vld [vmem:[#allocation13 + $0x80] sm:$0xff]
    %v1191 = vld [vmem:[#allocation13 + $0x88] sm:$0xff]
    %v1192 = vld [vmem:[#allocation13 + $0x90] sm:$0xff]
    %v1193 = vld [vmem:[#allocation13 + $0x98] sm:$0xff]
    %v1194 = vld [vmem:[#allocation13 + $0xa0] sm:$0xff]
    %v1195 = vld [vmem:[#allocation13 + $0xa8] sm:$0xff]
    %v1196 = vld [vmem:[#allocation13 + $0xb0] sm:$0xff]
    %v1197 = vld [vmem:[#allocation13 + $0xb8] sm:$0xff]
    %v1198 = vld [vmem:[#allocation13 + $0xc0] sm:$0xff]
    %v1199 = vld [vmem:[#allocation13 + $0xc8] sm:$0xff]
    %v1200 = vld [vmem:[#allocation13 + $0xd0] sm:$0xff]
    %v1201 = vld [vmem:[#allocation13 + $0xd8] sm:$0xff]
    %v1202 = vld [vmem:[#allocation13 + $0xe0] sm:$0xff]
    %v1203 = vld [vmem:[#allocation13 + $0xe8] sm:$0xff]
    %v1204 = vld [vmem:[#allocation13 + $0xf0] sm:$0xff]
    %v1205 = vld [vmem:[#allocation13 + $0xf8] sm:$0xff]
    %v1206 = vld [vmem:[%s8] sm:$0x1]
    %v1208 = vlaneseq
    %v1209 = vshrl.u32 %v1208, 7
    %v1210 = vsub.s32 0, %v1209
    %v1211 = vrot.slane %v1206, %v1210
    %1213 = vmatprep.subr.mxu0 0.0
    %1214 = vmatpush1.msra.mxu0 %v1174
    %1215 = vmatprep.subr.mxu0 0.0
    %1216 = vmatpush1.msra.mxu0 %v1175
    %1217 = vmatprep.subr.mxu0 0.0
    %1218 = vmatpush1.msra.mxu0 %v1176
    %1219 = vmatprep.subr.mxu0 0.0
    %1220 = vmatpush1.msra.mxu0 %v1177
    %1221 = vmatprep.subr.mxu0 0.0
    %1222 = vmatpush1.msra.mxu0 %v1178
    %1223 = vmatprep.subr.mxu0 0.0
    %1224 = vmatpush1.msra.mxu0 %v1179
    %1225 = vmatprep.subr.mxu0 0.0
    %1226 = vmatpush1.msra.mxu0 %v1180
    %1227 = vmatprep.subr.mxu0 0.0
    %1228 = vmatpush1.msra.mxu0 %v1181
    %1229 = vmatprep.subr.mxu0 0.0
    %1230 = vmatpush1.msra.mxu0 %v1182
    %1231 = vmatprep.subr.mxu0 0.0
    %1232 = vmatpush1.msra.mxu0 %v1183
    %1233 = vmatprep.subr.mxu0 0.0
    %1234 = vmatpush1.msra.mxu0 %v1184
    %1235 = vmatprep.subr.mxu0 0.0
    %1236 = vmatpush1.msra.mxu0 %v1185
    %1237 = vmatprep.subr.mxu0 0.0
    %1238 = vmatpush1.msra.mxu0 %v1186
    %1239 = vmatprep.subr.mxu0 0.0
    %1240 = vmatpush1.msra.mxu0 %v1187
    %1241 = vmatprep.subr.mxu0 0.0
    %1242 = vmatpush1.msra.mxu0 %v1188
    %1243 = vmatprep.subr.mxu0 0.0
    %1244 = vmatpush1.msra.mxu0 %v1189
    %1245 = vmatprep.subr.mxu0 0.0
    %1246 = vmatpush1.msra.mxu0 %v1190
    %1247 = vmatprep.subr.mxu0 0.0
    %1248 = vmatpush1.msra.mxu0 %v1191
    %1249 = vmatprep.subr.mxu0 0.0
    %1250 = vmatpush1.msra.mxu0 %v1192
    %1251 = vmatprep.subr.mxu0 0.0
    %1252 = vmatpush1.msra.mxu0 %v1193
    %1253 = vmatprep.subr.mxu0 0.0
    %1254 = vmatpush1.msra.mxu0 %v1194
    %1255 = vmatprep.subr.mxu0 0.0
    %1256 = vmatpush1.msra.mxu0 %v1195
    %1257 = vmatprep.subr.mxu0 0.0
    %1258 = vmatpush1.msra.mxu0 %v1196
    %1259 = vmatprep.subr.mxu0 0.0
    %1260 = vmatpush1.msra.mxu0 %v1197
    %1261 = vmatprep.subr.mxu0 0.0
    %1262 = vmatpush1.msra.mxu0 %v1198
    %1263 = vmatprep.subr.mxu0 0.0
    %1264 = vmatpush1.msra.mxu0 %v1199
    %1265 = vmatprep.subr.mxu0 0.0
    %1266 = vmatpush1.msra.mxu0 %v1200
    %1267 = vmatprep.subr.mxu0 0.0
    %1268 = vmatpush1.msra.mxu0 %v1201
    %1269 = vmatprep.subr.mxu0 0.0
    %1270 = vmatpush1.msra.mxu0 %v1202
    %1271 = vmatprep.subr.mxu0 0.0
    %1272 = vmatpush1.msra.mxu0 %v1203
    %1273 = vmatprep.subr.mxu0 0.0
    %1274 = vmatpush1.msra.mxu0 %v1204
    %1275 = vmatprep.subr.mxu0 0.0
    %1276 = vmatpush1.msra.mxu0 %v1205
    %1277 = vmatprep.mubr.f32.mxu0 %v1080
    %1278 = vmatmul.mubr.f32.gmra.mrb[0].mxu0 %v1158
    %v1279 = vpop.f32.mrb[0].mxu0
    %v1280 = vadd.f32 %v1211, %v1279
    %v1281 = vpop.f32.mrb[0].mxu0
    %1282 = vmatprep.mubr.f32.mxu0 %v1085
    %1283 = vmatmul.mubr.f32.gmra.mrb[0].mxu0 %v1159
    %v1284 = vpop.f32.mrb[0].mxu0
    %v1285 = vadd.f32 %v1211, %v1284
    %v1286 = vpop.f32.mrb[0].mxu0
    %1287 = vmatprep.mubr.f32.mxu0 %v1090
    %1288 = vmatmul.mubr.f32.gmra.mrb[0].mxu0 %v1160
    %v1289 = vpop.f32.mrb[0].mxu0
    %v1290 = vadd.f32 %v1211, %v1289
    %v1291 = vpop.f32.mrb[0].mxu0
    %1292 = vmatprep.mubr.f32.mxu0 %v1095
    %1293 = vmatmul.mubr.f32.gmra.mrb[0].mxu0 %v1161
    %v1294 = vpop.f32.mrb[0].mxu0
    %v1295 = vadd.f32 %v1211, %v1294
    %v1296 = vpop.f32.mrb[0].mxu0
    %1297 = vmatprep.mubr.f32.mxu0 %v1100
    %1298 = vmatmul.mubr.f32.gmra.mrb[0].mxu0 %v1162
    %v1299 = vpop.f32.mrb[0].mxu0
    %v1300 = vadd.f32 %v1211, %v1299
    %v1301 = vpop.f32.mrb[0].mxu0
    %1302 = vmatprep.mubr.f32.mxu0 %v1105
    %1303 = vmatmul.mubr.f32.gmra.mrb[0].mxu0 %v1163
    %v1304 = vpop.f32.mrb[0].mxu0
    %v1305 = vadd.f32 %v1211, %v1304
    %v1306 = vpop.f32.mrb[0].mxu0
    %1307 = vmatprep.mubr.f32.mxu0 %v1110
    %1308 = vmatmul.mubr.f32.gmra.mrb[0].mxu0 %v1164
    %v1309 = vpop.f32.mrb[0].mxu0
    %v1310 = vadd.f32 %v1211, %v1309
    %v1311 = vpop.f32.mrb[0].mxu0
    %1312 = vmatprep.mubr.f32.mxu0 %v1115
    %1313 = vmatmul.mubr.f32.gmra.mrb[0].mxu0 %v1165
    %v1314 = vpop.f32.mrb[0].mxu0
    %v1315 = vadd.f32 %v1211, %v1314
    %v1316 = vpop.f32.mrb[0].mxu0
    %1317 = vmatprep.mubr.f32.mxu0 %v1120
    %1318 = vmatmul.mubr.f32.gmra.mrb[0].mxu0 %v1166
    %v1319 = vpop.f32.mrb[0].mxu0
    %v1320 = vadd.f32 %v1211, %v1319
    %v1321 = vpop.f32.mrb[0].mxu0
    %1322 = vmatprep.mubr.f32.mxu0 %v1125
    %1323 = vmatmul.mubr.f32.gmra.mrb[0].mxu0 %v1167
    %v1324 = vpop.f32.mrb[0].mxu0
    %v1325 = vadd.f32 %v1211, %v1324
    %v1326 = vpop.f32.mrb[0].mxu0
    %1327 = vmatprep.mubr.f32.mxu0 %v1130
    %1328 = vmatmul.mubr.f32.gmra.mrb[0].mxu0 %v1168
    %v1329 = vpop.f32.mrb[0].mxu0
    %v1330 = vadd.f32 %v1211, %v1329
    %v1331 = vpop.f32.mrb[0].mxu0
    %1332 = vmatprep.mubr.f32.mxu0 %v1135
    %1333 = vmatmul.mubr.f32.gmra.mrb[0].mxu0 %v1169
    %v1334 = vpop.f32.mrb[0].mxu0
    %v1335 = vadd.f32 %v1211, %v1334
    %v1336 = vpop.f32.mrb[0].mxu0
    %1337 = vmatprep.mubr.f32.mxu0 %v1140
    %1338 = vmatmul.mubr.f32.gmra.mrb[0].mxu0 %v1170
    %v1339 = vpop.f32.mrb[0].mxu0
    %v1340 = vadd.f32 %v1211, %v1339
    %v1341 = vpop.f32.mrb[0].mxu0
    %1342 = vmatprep.mubr.f32.mxu0 %v1145
    %1343 = vmatmul.mubr.f32.gmra.mrb[0].mxu0 %v1171
    %v1344 = vpop.f32.mrb[0].mxu0
    %v1345 = vadd.f32 %v1211, %v1344
    %v1346 = vpop.f32.mrb[0].mxu0
    %1347 = vmatprep.mubr.f32.mxu0 %v1150
    %1348 = vmatmul.mubr.f32.gmra.mrb[0].mxu0 %v1172
    %v1349 = vpop.f32.mrb[0].mxu0
    %v1350 = vadd.f32 %v1211, %v1349
    %v1351 = vpop.f32.mrb[0].mxu0
    %1352 = vmatprep.mubr.f32.mxu0 %v1155
    %1353 = vmatmul.mubr.f32.gmra.mrb[0].mxu0 %v1173
    %v1354 = vpop.f32.mrb[0].mxu0
    %v1355 = vadd.f32 %v1211, %v1354
    %v1356 = vpop.f32.mrb[0].mxu0
    %1357 = vdwg.mxu0
    %v1358 = vmax.f32 %v1280, 0.0
    %v1359 = vmax.f32 %v1285, 0.0
    %v1360 = vmax.f32 %v1290, 0.0
    %v1361 = vmax.f32 %v1295, 0.0
    %v1362 = vmax.f32 %v1300, 0.0
    %v1363 = vmax.f32 %v1305, 0.0
    %v1364 = vmax.f32 %v1310, 0.0
    %v1365 = vmax.f32 %v1315, 0.0
    %v1366 = vmax.f32 %v1320, 0.0
    %v1367 = vmax.f32 %v1325, 0.0
    %v1368 = vmax.f32 %v1330, 0.0
    %v1369 = vmax.f32 %v1335, 0.0
    %v1370 = vmax.f32 %v1340, 0.0
    %v1371 = vmax.f32 %v1345, 0.0
    %v1372 = vmax.f32 %v1350, 0.0
    %v1373 = vmax.f32 %v1355, 0.0
    %v1374 = vld [vmem:[%s4] sm:$0xff]
    %1375 = vmatprep.subr.mxu0 0.0
    %1376 = vmatpush1.msra.mxu0 %v1358
    %1377 = vmatprep.subr.mxu0 0.0
    %1378 = vmatpush1.msra.mxu0 %v1359
    %1379 = vmatprep.subr.mxu0 0.0
    %1380 = vmatpush1.msra.mxu0 %v1360
    %1381 = vmatprep.subr.mxu0 0.0
    %1382 = vmatpush1.msra.mxu0 %v1361
    %1383 = vmatprep.subr.mxu0 0.0
    %1384 = vmatpush1.msra.mxu0 %v1362
    %1385 = vmatprep.subr.mxu0 0.0
    %1386 = vmatpush1.msra.mxu0 %v1363
    %1387 = vmatprep.subr.mxu0 0.0
    %1388 = vmatpush1.msra.mxu0 %v1364
    %1389 = vmatprep.subr.mxu0 0.0
    %1390 = vmatpush1.msra.mxu0 %v1365
    %1391 = vmatprep.subr.mxu0 0.0
    %1392 = vmatpush1.msra.mxu0 %v1366
    %1393 = vmatprep.subr.mxu0 0.0
    %1394 = vmatpush1.msra.mxu0 %v1367
    %1395 = vmatprep.subr.mxu0 0.0
    %1396 = vmatpush1.msra.mxu0 %v1368
    %1397 = vmatprep.subr.mxu0 0.0
    %1398 = vmatpush1.msra.mxu0 %v1369
    %1399 = vmatprep.subr.mxu0 0.0
    %1400 = vmatpush1.msra.mxu0 %v1370
    %1401 = vmatprep.subr.mxu0 0.0
    %1402 = vmatpush1.msra.mxu0 %v1371
    %1403 = vmatprep.subr.mxu0 0.0
    %1404 = vmatpush1.msra.mxu0 %v1372
    %1405 = vmatprep.subr.mxu0 0.0
    %1406 = vmatpush1.msra.mxu0 %v1373
    %1407 = vmatprep.subr.mxu0 0.0
    %1408 = vmatpush1.msra.mxu0 0.0
    %1409 = vmatprep.subr.mxu0 0.0
    %1410 = vmatpush1.msra.mxu0 0.0
    %1411 = vmatprep.subr.mxu0 0.0
    %1412 = vmatpush1.msra.mxu0 0.0
    %1413 = vmatprep.subr.mxu0 0.0
    %1414 = vmatpush1.msra.mxu0 0.0
    %1415 = vmatprep.subr.mxu0 0.0
    %1416 = vmatpush1.msra.mxu0 0.0
    %1417 = vmatprep.subr.mxu0 0.0
    %1418 = vmatpush1.msra.mxu0 0.0
    %1419 = vmatprep.subr.mxu0 0.0
    %1420 = vmatpush1.msra.mxu0 0.0
    %1421 = vmatprep.subr.mxu0 0.0
    %1422 = vmatpush1.msra.mxu0 0.0
    %1423 = vmatprep.subr.mxu0 0.0
    %1424 = vmatpush1.msra.mxu0 0.0
    %1425 = vmatprep.subr.mxu0 0.0
    %1426 = vmatpush1.msra.mxu0 0.0
    %1427 = vmatprep.subr.mxu0 0.0
    %1428 = vmatpush1.msra.mxu0 0.0
    %1429 = vmatprep.subr.mxu0 0.0
    %1430 = vmatpush1.msra.mxu0 0.0
    %1431 = vmatprep.subr.mxu0 0.0
    %1432 = vmatpush1.msra.mxu0 0.0
    %1433 = vmatprep.subr.mxu0 0.0
    %1434 = vmatpush1.msra.mxu0 0.0
    %1435 = vmatprep.subr.mxu0 0.0
    %1436 = vmatpush1.msra.mxu0 0.0
    %1437 = vmatprep.subr.mxu0 0.0
    %1438 = vmatpush1.msra.mxu0 0.0
    %1439 = vmatprep.mubr.f32.mxu0 0.0
    %1440 = vmatmul.mubr.f32.gmra.mrb[0].mxu0 %v1374
    %v1441 = vpop.f32.mrb[0].mxu0
    %v1442 = vadd.f32 0.0, %v1441
    %v1443 = vpop.f32.mrb[0].mxu0
    %1444 = vdwg.mxu0
    %1445 = vst [vmem:[#allocation14] sm:$0xff] %v1442
    // Predicated region
    $region66: #{tpu_custom_call.1} parent=1 // pred_check
      _
    $region67: #{tpu_custom_call.1} parent=1 // pred_check_branch
      %1447 = sbr.rel (0) target = $region69
    $region68: #{tpu_custom_call.1} parent=1 // pred_region
      %s1449 = ssub.s32 128, 128
      %1450 = vsyncadd [#allocation4], %s1449
      %s1452 = sshll.u32 [#allocation14], 4
      %s1453 = int_to_ptr.vmem [resolvable:$true] %s1452
      %1455 = dma.vmem_to_hbm [thread:$0]  %s1453, 128, %s9, [#allocation4]
    $region69: #{tpu_custom_call.1} parent=1 // pred_fallthru
      _
    // Predicated region
    $region70: #{tpu_custom_call.1} parent=1 // pred_check
      _
    $region71: #{tpu_custom_call.1} parent=1 // pred_check_branch
      %1457 = sbr.rel (0) target = $region73
    $region72: #{tpu_custom_call.1} parent=1 // pred_region
      %1458 = dma.done [#allocation4], 128
    $region73: #{tpu_custom_call.1} parent=1 // pred_fallthru
      _
    %1459 = vsyncpa [#allocation3], 1
    %1460 = vsyncpa [#allocation6], 1
    %1461 = vsyncpa [#allocation9], 1
    %1462 = vsyncpa [#allocation12], 1
    %1463 = vsyncpa [#allocation4], 1

</llo_original>
